<compile_context>
chip_gen: v7x
topology: tpu7x:2x2x1
jax: 0.10.0
libtpu: 0.0.40
codegen_flags: <defaults>
</compile_context>

<pallas_src>
import functools

import jax
import jax.numpy as jnp
from jax import lax
from jax.experimental import pallas as pl
from jax.experimental.pallas import tpu as pltpu

BN_EPS = 1e-5
LANE = 128
SUBLANE = 8
VMEM_LIMIT = 32 * 1024 * 1024  # safe on v5e/v6e (128 MiB) and v7x (64 MiB/TC)


def _round_up(x, m):
    return (x + m - 1) // m * m


def _choose_imgs_per_block(n_imgs, rows_per_img, lane_pad, target_bytes=4 << 20):
    """Largest divisor of n_imgs whose bf16 input slab stays under target_bytes
    while keeping >= 2 grid steps (>= 1 per v7x TensorCore)."""
    best = 1
    for d in range(1, n_imgs + 1):
        if n_imgs % d:
            continue
        if d * rows_per_img * lane_pad * 2 > target_bytes:
            continue
        if n_imgs // d >= 2:
            best = d
    return best


# ---------------------------------------------------------------------------
# Kernel A: conv (KH shifted matmuls vs. block-Toeplitz weight) + bias + ReLU,
# optional fused input-side BatchNorm affine (previous stage's folded BN), and
# merged per-block partial BN statistics.
# ---------------------------------------------------------------------------
def _conv_stage_kernel(*refs, b_imgs, in_stride, h_in, ho, kh_taps, pad,
                       out_stride, out_off, fuse_in_bn):
    if fuse_in_bn:
        (x_ref, w_ref, b_ref, sc_ref, sh_ref, y_ref, st_ref, xbn_ref) = refs
    else:
        (x_ref, w_ref, b_ref, y_ref, st_ref) = refs
        xbn_ref = None

    npad = y_ref.shape[-1]
    bias = b_ref[...]                                     # (1, npad) f32

    if fuse_in_bn:
        # Fused "kernel B": apply the previous stage's folded BN scale/shift to
        # the interior rows of the freshly loaded tile.  Border / padding rows
        # must stay exactly zero (conv zero-padding), so re-zero the scratch
        # each step and only write interior rows.
        xbn_ref[...] = jnp.zeros_like(xbn_ref)
        scale_in = sc_ref[...]                            # (1, kin_pad) f32
        shift_in = sh_ref[...]
        for ii in range(b_imgs):
            r0 = ii * in_stride + pad
            xin = x_ref[pl.ds(r0, h_in), :].astype(jnp.float32)
            xbn_ref[pl.ds(r0, h_in), :] = (
                xin * scale_in + shift_in).astype(jnp.bfloat16)
        src = xbn_ref
    else:
        src = x_ref

    sum_acc = jnp.zeros((1, npad), jnp.float32)
    ssq_acc = jnp.zeros((1, npad), jnp.float32)

    for ii in range(b_imgs):
        # Tap accumulation over the KH kernel rows; the KW taps are folded into
        # the block-Toeplitz weight so each tap is one lane-dense MXU matmul.
        acc = jnp.zeros((ho, npad), jnp.float32)
        for kh in range(kh_taps):
            lhs = src[pl.ds(ii * in_stride + kh, ho), :]  # (ho, kin_pad) bf16
            acc = acc + jnp.dot(lhs, w_ref[kh],
                                preferred_element_type=jnp.float32)
        y = jnp.maximum(acc + bias, 0.0)                  # bias + ReLU, f32
        yb = y.astype(jnp.bfloat16)                       # bf16 intermediate
        y32 = yb.astype(jnp.float32)                      # stats match stored y

        sum_acc = sum_acc + jnp.sum(y32, axis=0, keepdims=True)
        ssq_acc = ssq_acc + jnp.sum(y32 * y32, axis=0, keepdims=True)

        # Store in the next consumer's layout: zero H-border rows + interior.
        base = ii * out_stride
        if out_off > 0:
            y_ref[pl.ds(base, out_off), :] = jnp.zeros((out_off, npad),
                                                       jnp.bfloat16)
        y_ref[pl.ds(base + out_off, ho), :] = yb
        tail = out_stride - out_off - ho
        if tail > 0:
            y_ref[pl.ds(base + out_off + ho, tail), :] = jnp.zeros(
                (tail, npad), jnp.bfloat16)

    # Merged partial statistics: one (1, 2, npad) block per grid step.
    st_ref[...] = jnp.concatenate([sum_acc, ssq_acc], axis=0).reshape(1, 2, npad)


# ---------------------------------------------------------------------------
# Kernel C: final BatchNorm affine  y * scale + shift  (bf16 in, f32 out).
# ---------------------------------------------------------------------------
def _bn_apply_kernel(y_ref, sc_ref, sh_ref, o_ref):
    o_ref[...] = y_ref[...].astype(jnp.float32) * sc_ref[...] + sh_ref[...]


# ---------------------------------------------------------------------------
# Wrapper-side helpers (tiny, run once per stage).
# ---------------------------------------------------------------------------
def _toeplitz_weight(w_oihw, w_in, pad, stride, kin_pad, nout_pad):
    """OIHW conv weight -> (KH, W_in*Cin [pad], W_out*Cout [pad]) block-Toeplitz
    matrices so that each kh tap becomes one matmul over the row layout."""
    cout, cin, kh, kw = w_oihw.shape
    w_out = (w_in + 2 * pad - kw) // stride + 1
    wt = jnp.transpose(w_oihw, (2, 3, 1, 0)).astype(jnp.float32)   # (KH,KW,Ci,Co)
    win_i = jnp.arange(w_in)
    wout_i = jnp.arange(w_out)
    kw_i = jnp.arange(kw)
    # E[kw, win, wout] = 1 iff input column win feeds output column wout at tap
    # kw.  Out-of-range taps (zero W-padding) simply have no matching row.
    e_sel = (win_i[None, :, None]
             == (wout_i[None, None, :] * stride + kw_i[:, None, None] - pad)
             ).astype(jnp.float32)                                  # (KW,Win,Wout)
    big = jnp.einsum("hkio,kpq->hpiqo", wt, e_sel)         # (KH,Win,Ci,Wout,Co)
    big = big.reshape(kh, w_in * cin, w_out * cout)
    big = jnp.pad(big, ((0, 0), (0, kin_pad - w_in * cin),
                        (0, nout_pad - w_out * cout)))
    return big.astype(jnp.bfloat16)


def _per_lane_row(vec_c, w_out, lane_pad):
    """Per-channel vector -> per-lane (1, lane_pad) row; lane = w*Cout + c."""
    row = jnp.tile(vec_c.astype(jnp.float32), (w_out,))
    return jnp.pad(row, (0, lane_pad - row.shape[0])).reshape(1, lane_pad)


def _finalize_bn(stats, w_out, c_out, m_count, gamma, beta):
    """Combine per-block partial sums into folded BN scale/shift per channel."""
    lane = w_out * c_out
    s = jnp.sum(stats[:, 0, :lane], axis=0).reshape(w_out, c_out).sum(axis=0)
    ss = jnp.sum(stats[:, 1, :lane], axis=0).reshape(w_out, c_out).sum(axis=0)
    mean = s / m_count
    # E[x^2] - E[x]^2 in f32, clamped at 0.  Fine at these sizes; for very
    # large M a shifted accumulation would be more robust (known limitation).
    var = jnp.maximum(ss / m_count - mean * mean, 0.0)
    scale = gamma.astype(jnp.float32) * lax.rsqrt(var + BN_EPS)
    shift = beta.astype(jnp.float32) - mean * scale
    return scale, shift


def _conv_stage(x_rows, w_big, bias_row, *, n_imgs, b_imgs, in_stride, h_in,
                ho, pad, out_stride, out_off, scale_row=None, shift_row=None):
    fuse_in_bn = scale_row is not None
    n_blocks = n_imgs // b_imgs
    kin_pad = x_rows.shape[-1]
    kh_taps, _, npad = w_big.shape

    kernel = functools.partial(
        _conv_stage_kernel, b_imgs=b_imgs, in_stride=in_stride, h_in=h_in,
        ho=ho, kh_taps=kh_taps, pad=pad, out_stride=out_stride,
        out_off=out_off, fuse_in_bn=fuse_in_bn)

    in_specs = [
        pl.BlockSpec((b_imgs * in_stride, kin_pad), lambda i: (i, 0)),
        pl.BlockSpec((kh_taps, kin_pad, npad), lambda i: (0, 0, 0)),
        pl.BlockSpec((1, npad), lambda i: (0, 0)),
    ]
    inputs = [x_rows, w_big, bias_row]
    scratch = []
    if fuse_in_bn:
        in_specs += [pl.BlockSpec((1, kin_pad), lambda i: (0, 0)),
                     pl.BlockSpec((1, kin_pad), lambda i: (0, 0))]
        inputs += [scale_row, shift_row]
        scratch = [pltpu.VMEM((b_imgs * in_stride, kin_pad), jnp.bfloat16)]

    flops = 2 * n_imgs * ho * kh_taps * kin_pad * npad
    bytes_acc = (x_rows.size * 2 + w_big.size * 2
                 + n_imgs * out_stride * npad * 2 + n_blocks * 2 * npad * 4)

    y_rows, stats = pl.pallas_call(
        kernel,
        grid=(n_blocks,),
        in_specs=in_specs,
        out_specs=(
            pl.BlockSpec((b_imgs * out_stride, npad), lambda i: (i, 0)),
            pl.BlockSpec((1, 2, npad), lambda i: (i, 0, 0)),
        ),
        out_shape=(
            jax.ShapeDtypeStruct((n_imgs * out_stride, npad), jnp.bfloat16),
            jax.ShapeDtypeStruct((n_blocks, 2, npad), jnp.float32),
        ),
        scratch_shapes=scratch,
        compiler_params=pltpu.CompilerParams(
            dimension_semantics=("parallel",),
            vmem_limit_bytes=VMEM_LIMIT),
        cost_estimate=pl.CostEstimate(flops=flops, transcendentals=0,
                                      bytes_accessed=bytes_acc),
    )(*inputs)
    return y_rows, stats


def _bn_apply(y_rows, scale_row, shift_row, *, tile_rows):
    rows, npad = y_rows.shape
    n_tiles = rows // tile_rows
    return pl.pallas_call(
        _bn_apply_kernel,
        grid=(n_tiles,),
        in_specs=[pl.BlockSpec((tile_rows, npad), lambda i: (i, 0)),
                  pl.BlockSpec((1, npad), lambda i: (0, 0)),
                  pl.BlockSpec((1, npad), lambda i: (0, 0))],
        out_specs=pl.BlockSpec((tile_rows, npad), lambda i: (i, 0)),
        out_shape=jax.ShapeDtypeStruct((rows, npad), jnp.float32),
        compiler_params=pltpu.CompilerParams(
            dimension_semantics=("parallel",),
            vmem_limit_bytes=VMEM_LIMIT),
        cost_estimate=pl.CostEstimate(flops=2 * rows * npad, transcendentals=0,
                                      bytes_accessed=rows * npad * 6),
    )(y_rows, scale_row, shift_row)


# ---------------------------------------------------------------------------
# Full ConvBlock forward (NCHW in / NCHW out, like the PyTorch module).
# ---------------------------------------------------------------------------
def conv_block_forward(x_nchw, params, padding=1, stride=1, imgs_per_block=None):
    if stride != 1:
        raise NotImplementedError("Pallas ConvBlock path supports stride=1")  # TODO(synk)
    n_imgs, cin, h, w = x_nchw.shape
    cout, _, khs, kws = params["w1"].shape
    pad = padding

    ho1 = h + 2 * pad - khs + 1
    wo1 = w + 2 * pad - kws + 1
    ho2 = ho1 + 2 * pad - khs + 1
    wo2 = wo1 + 2 * pad - kws + 1

    in_stride1 = _round_up(h + 2 * pad, SUBLANE)           # rows/img, stage-1 in
    k1pad = _round_up(w * cin, LANE)
    n1pad = _round_up(wo1 * cout, LANE)
    out_stride1 = _round_up(ho1 + 2 * pad, SUBLANE)        # == stage-2 in stride
    n2pad = _round_up(wo2 * cout, LANE)
    out_stride2 = _round_up(ho2, SUBLANE)

    if imgs_per_block is None:
        b_imgs = _choose_imgs_per_block(n_imgs, in_stride1, k1pad)
    else:
        assert n_imgs % imgs_per_block == 0
        b_imgs = imgs_per_block

    # Stage-1 input in row layout: (N * in_stride1, k1pad) bf16, zero H borders.
    x_nhwc = jnp.transpose(x_nchw, (0, 2, 3, 1)).astype(jnp.bfloat16)
    x_rows = jnp.zeros((n_imgs, in_stride1, k1pad), jnp.bfloat16)
    x_rows = x_rows.at[:, pad:pad + h, :w * cin].set(x_nhwc.reshape(n_imgs, h, w * cin))
    x_rows = x_rows.reshape(n_imgs * in_stride1, k1pad)

    # ---- Stage 1: Conv + bias + ReLU (+ partial BN stats) -----------------
    w1_big = _toeplitz_weight(params["w1"], w, pad, stride, k1pad, n1pad)
    b1_row = _per_lane_row(params["b1"], wo1, n1pad)
    y1, stats1 = _conv_stage(
        x_rows, w1_big, b1_row, n_imgs=n_imgs, b_imgs=b_imgs,
        in_stride=in_stride1, h_in=h, ho=ho1, pad=pad,
        out_stride=out_stride1, out_off=pad)

    scale1, shift1 = _finalize_bn(stats1, wo1, cout, n_imgs * ho1 * wo1,
                                  params["g1"], params["beta1"])
    scale1_row = _per_lane_row(scale1, wo1, n1pad)
    shift1_row = _per_lane_row(shift1, wo1, n1pad)

    # ---- Stage 2: fused BN1-apply + Conv + bias + ReLU (+ stats) ----------
    w2_big = _toeplitz_weight(params["w2"], wo1, pad, stride, n1pad, n2pad)
    b2_row = _per_lane_row(params["b2"], wo2, n2pad)
    y2, stats2 = _conv_stage(
        y1, w2_big, b2_row, n_imgs=n_imgs, b_imgs=b_imgs,
        in_stride=out_stride1, h_in=ho1, ho=ho2, pad=pad,
        out_stride=out_stride2, out_off=0,
        scale_row=scale1_row, shift_row=shift1_row)

    scale2, shift2 = _finalize_bn(stats2, wo2, cout, n_imgs * ho2 * wo2,
                                  params["g2"], params["beta2"])
    scale2_row = _per_lane_row(scale2, wo2, n2pad)
    shift2_row = _per_lane_row(shift2, wo2, n2pad)

    # ---- Final BN apply (single lightweight pass) -------------------------
    out_rows = _bn_apply(y2, scale2_row, shift2_row,
                         tile_rows=b_imgs * out_stride2)

    out = out_rows.reshape(n_imgs, out_stride2, n2pad)[:, :ho2, :wo2 * cout]
    out = out.reshape(n_imgs, ho2, wo2, cout)
    return jnp.transpose(out, (0, 3, 1, 2))                # NHWC -> NCHW


# ---------------------------------------------------------------------------
# Pure-JAX reference.  It mirrors the bf16 quantization of the matmul operands
# and of the stored pre-BN intermediate (f32 accumulation / statistics), so
# the comparison validates the kernel math at a tight tolerance.  (Parity with
# PyTorch's full-f32 conv would need looser tolerances.)
# ---------------------------------------------------------------------------
def conv_block_reference(x_nchw, params, padding=1, stride=1):
    def q(a):
        return a.astype(jnp.bfloat16).astype(jnp.float32)

    def stage(x, wt, b, g, be):
        y = lax.conv_general_dilated(
            q(x), q(wt), (stride, stride),
            [(padding, padding), (padding, padding)],
            dimension_numbers=("NCHW", "OIHW", "NCHW"),
            precision=lax.Precision.HIGHEST)
        y = q(jnp.maximum(y + b[None, :, None, None], 0.0))
        mean = jnp.mean(y, axis=(0, 2, 3), keepdims=True)
        var = jnp.mean(jnp.square(y - mean), axis=(0, 2, 3), keepdims=True)
        y = (y - mean) / jnp.sqrt(var + BN_EPS)
        return y * g[None, :, None, None] + be[None, :, None, None]

    y = stage(x_nchw, params["w1"], params["b1"], params["g1"], params["beta1"])
    y = stage(y, params["w2"], params["b2"], params["g2"], params["beta2"])
    return y


if __name__ == "__main__":
    # ConvBlock(in_channels=4, out_channels=8, kernel_size=3, padding=1,
    # stride=1) applied to x: (2, 4, 16, 16).
    N, Cin, H, W = 2, 4, 16, 16
    Cout, K = 8, 3

    key = jax.random.PRNGKey(0)
    k1, k2, k3, k4, kx = jax.random.split(key, 5)
    params = {
        "w1": jax.random.normal(k1, (Cout, Cin, K, K), jnp.float32) * 0.2,
        "b1": jax.random.normal(k2, (Cout,), jnp.float32) * 0.1,
        "g1": jnp.ones((Cout,), jnp.float32),       # BN affine defaults
        "beta1": jnp.zeros((Cout,), jnp.float32),
        "w2": jax.random.normal(k3, (Cout, Cout, K, K), jnp.float32) * 0.2,
        "b2": jax.random.normal(k4, (Cout,), jnp.float32) * 0.1,
        "g2": jnp.ones((Cout,), jnp.float32),
        "beta2": jnp.zeros((Cout,), jnp.float32),
    }
    x = jax.random.normal(kx, (N, Cin, H, W), jnp.float32)

    fwd = jax.jit(conv_block_forward)
    out = jax.block_until_ready(fwd(x, params))
    ref = jax.block_until_ready(conv_block_reference(x, params))

    assert out.shape == (N, Cout, H, W), out.shape
    if not jnp.allclose(out, ref, rtol=1e-2, atol=1e-2):
        err = float(jnp.max(jnp.abs(out - ref)))
        raise AssertionError(f"Pallas ConvBlock mismatch, max abs err {err}")

    print("KERNEL_OK")
</pallas_src>

<mosaic_0001>
module attributes {stable_mosaic.version = 11 : i64} {
  func.func @_conv_stage_kernel(%arg0: i32, %arg1: memref<24x128xbf16, #tpu.memory_space<vmem>>, %arg2: memref<3x128x128xbf16, #tpu.memory_space<vmem>>, %arg3: memref<1x128xf32, #tpu.memory_space<vmem>>, %arg4: memref<24x128xbf16, #tpu.memory_space<vmem>>, %arg5: memref<1x2x128xf32, #tpu.memory_space<vmem>>) attributes {dimension_semantics = [#tpu.dimension_semantics<parallel>], iteration_bounds = array<i64: 2>, scalar_prefetch = 0 : i64, scratch_operands = 0 : i64, tpu.core_type = #tpu.core_type<tc>, window_params = [{transform_indices = @transform_0, window_bounds = array<i64: 24, 128>}, {pipeline_mode = #tpu.pipeline_mode<synchronous>, transform_indices = @transform_1, window_bounds = array<i64: 3, 128, 128>}, {pipeline_mode = #tpu.pipeline_mode<synchronous>, transform_indices = @transform_2, window_bounds = array<i64: 1, 128>}, {transform_indices = @transform_3, window_bounds = array<i64: 24, 128>}, {transform_indices = @transform_4, window_bounds = array<i64: 1, 2, 128>}]} {
    %c0 = arith.constant 0 : index
    %c0_0 = arith.constant 0 : index
    %0 = vector.load %arg3[%c0, %c0_0] : memref<1x128xf32, #tpu.memory_space<vmem>>, vector<1x128xf32>
    %cst = arith.constant 0.000000e+00 : f32
    %1 = vector.broadcast %cst : f32 to vector<1x128xf32>
    %cst_1 = arith.constant 0.000000e+00 : f32
    %2 = vector.broadcast %cst_1 : f32 to vector<1x128xf32>
    %cst_2 = arith.constant 0.000000e+00 : f32
    %3 = vector.broadcast %cst_2 : f32 to vector<16x128xf32>
    %c0_3 = arith.constant 0 : index
    %c0_4 = arith.constant 0 : index
    %4 = vector.load %arg1[%c0_3, %c0_4] : memref<24x128xbf16, #tpu.memory_space<vmem>>, vector<16x128xbf16>
    %c0_5 = arith.constant 0 : index
    %c0_6 = arith.constant 0 : index
    %c0_7 = arith.constant 0 : index
    %5 = vector.load %arg2[%c0_5, %c0_6, %c0_7] : memref<3x128x128xbf16, #tpu.memory_space<vmem>>, vector<1x128x128xbf16>
    %6 = vector.shape_cast %5 : vector<1x128x128xbf16> to vector<128x128xbf16>
    %cst_8 = arith.constant dense<0.000000e+00> : vector<16x128xf32>
    %7 = tpu.matmul %4, %6, %cst_8 {dimension_numbers = #tpu.dot_dimension_numbers<[1], [0], [0], [1], [0, 0, 1, 1], [], []>} : vector<16x128xbf16>, vector<128x128xbf16>, vector<16x128xf32> -> vector<16x128xf32>
    %8 = arith.addf %3, %7 : vector<16x128xf32>
    %c1 = arith.constant 1 : index
    %c0_9 = arith.constant 0 : index
    %9 = vector.load %arg1[%c1, %c0_9] : memref<24x128xbf16, #tpu.memory_space<vmem>>, vector<16x128xbf16>
    %c1_10 = arith.constant 1 : index
    %c0_11 = arith.constant 0 : index
    %c0_12 = arith.constant 0 : index
    %10 = vector.load %arg2[%c1_10, %c0_11, %c0_12] : memref<3x128x128xbf16, #tpu.memory_space<vmem>>, vector<1x128x128xbf16>
    %11 = vector.shape_cast %10 : vector<1x128x128xbf16> to vector<128x128xbf16>
    %cst_13 = arith.constant dense<0.000000e+00> : vector<16x128xf32>
    %12 = tpu.matmul %9, %11, %cst_13 {dimension_numbers = #tpu.dot_dimension_numbers<[1], [0], [0], [1], [0, 0, 1, 1], [], []>} : vector<16x128xbf16>, vector<128x128xbf16>, vector<16x128xf32> -> vector<16x128xf32>
    %13 = arith.addf %8, %12 : vector<16x128xf32>
    %c2 = arith.constant 2 : index
    %c0_14 = arith.constant 0 : index
    %14 = vector.load %arg1[%c2, %c0_14] : memref<24x128xbf16, #tpu.memory_space<vmem>>, vector<16x128xbf16>
    %c2_15 = arith.constant 2 : index
    %c0_16 = arith.constant 0 : index
    %c0_17 = arith.constant 0 : index
    %15 = vector.load %arg2[%c2_15, %c0_16, %c0_17] : memref<3x128x128xbf16, #tpu.memory_space<vmem>>, vector<1x128x128xbf16>
    %16 = vector.shape_cast %15 : vector<1x128x128xbf16> to vector<128x128xbf16>
    %cst_18 = arith.constant dense<0.000000e+00> : vector<16x128xf32>
    %17 = tpu.matmul %14, %16, %cst_18 {dimension_numbers = #tpu.dot_dimension_numbers<[1], [0], [0], [1], [0, 0, 1, 1], [], []>} : vector<16x128xbf16>, vector<128x128xbf16>, vector<16x128xf32> -> vector<16x128xf32>
    %18 = arith.addf %13, %17 : vector<16x128xf32>
    %19 = vector.broadcast %0 : vector<1x128xf32> to vector<16x128xf32>
    %20 = arith.addf %18, %19 : vector<16x128xf32>
    %cst_19 = arith.constant 0.000000e+00 : f32
    %21 = vector.broadcast %cst_19 : f32 to vector<16x128xf32>
    %22 = arith.maximumf %20, %21 : vector<16x128xf32>
    %23 = arith.truncf %22 : vector<16x128xf32> to vector<16x128xbf16>
    %24 = arith.extf %23 : vector<16x128xbf16> to vector<16x128xf32>
    %cst_20 = arith.constant dense<0.000000e+00> : vector<128xf32>
    %25 = vector.multi_reduction <add>, %24, %cst_20 [0] : vector<16x128xf32> to vector<128xf32>
    %26 = vector.shape_cast %25 : vector<128xf32> to vector<1x128xf32>
    %27 = arith.addf %1, %26 : vector<1x128xf32>
    %28 = arith.mulf %24, %24 : vector<16x128xf32>
    %cst_21 = arith.constant dense<0.000000e+00> : vector<128xf32>
    %29 = vector.multi_reduction <add>, %28, %cst_21 [0] : vector<16x128xf32> to vector<128xf32>
    %30 = vector.shape_cast %29 : vector<128xf32> to vector<1x128xf32>
    %31 = arith.addf %2, %30 : vector<1x128xf32>
    %cst_22 = arith.constant 0.000000e+00 : bf16
    %32 = vector.broadcast %cst_22 : bf16 to vector<1x128xbf16>
    %c0_23 = arith.constant 0 : index
    %c0_24 = arith.constant 0 : index
    %33 = vector.load %arg4[%c0_23, %c0_24] : memref<24x128xbf16, #tpu.memory_space<vmem>>, vector<1x128xbf16>
    tpu.vector_store %arg4[%c0_23, %c0_24], %32 {strides = array<i32>} : memref<24x128xbf16, #tpu.memory_space<vmem>>, vector<1x128xbf16>,
    %c1_25 = arith.constant 1 : index
    %c0_26 = arith.constant 0 : index
    %34 = vector.load %arg4[%c1_25, %c0_26] : memref<24x128xbf16, #tpu.memory_space<vmem>>, vector<16x128xbf16>
    tpu.vector_store %arg4[%c1_25, %c0_26], %23 {strides = array<i32>} : memref<24x128xbf16, #tpu.memory_space<vmem>>, vector<16x128xbf16>,
    %cst_27 = arith.constant 0.000000e+00 : bf16
    %35 = vector.broadcast %cst_27 : bf16 to vector<7x128xbf16>
    %c17 = arith.constant 17 : index
    %c0_28 = arith.constant 0 : index
    %36 = vector.load %arg4[%c17, %c0_28] : memref<24x128xbf16, #tpu.memory_space<vmem>>, vector<7x128xbf16>
    tpu.vector_store %arg4[%c17, %c0_28], %35 {strides = array<i32>} : memref<24x128xbf16, #tpu.memory_space<vmem>>, vector<7x128xbf16>,
    %37 = tpu.concatenate %27, %31 in 0 : vector<1x128xf32>, vector<1x128xf32> -> vector<2x128xf32>
    %38 = vector.shape_cast %37 : vector<2x128xf32> to vector<1x2x128xf32>
    %c0_29 = arith.constant 0 : index
    %c0_30 = arith.constant 0 : index
    %c0_31 = arith.constant 0 : index
    %39 = vector.load %arg5[%c0_29, %c0_30, %c0_31] : memref<1x2x128xf32, #tpu.memory_space<vmem>>, vector<1x2x128xf32>
    tpu.vector_store %arg5[%c0_29, %c0_30, %c0_31], %38 {strides = array<i32>} : memref<1x2x128xf32, #tpu.memory_space<vmem>>, vector<1x2x128xf32>,
    return
  }
  func.func @transform_0(%arg0: i32) -> (i32, i32) {
    %c0_i32 = arith.constant 0 : i32
    %c0_i32_0 = arith.constant 0 : i32
    return %arg0, %c0_i32 : i32, i32
  }
  func.func @transform_1(%arg0: i32) -> (i32, i32, i32) {
    %c0_i32 = arith.constant 0 : i32
    %c0_i32_0 = arith.constant 0 : i32
    %c0_i32_1 = arith.constant 0 : i32
    %c0_i32_2 = arith.constant 0 : i32
    return %c0_i32, %c0_i32_0, %c0_i32_1 : i32, i32, i32
  }
  func.func @transform_2(%arg0: i32) -> (i32, i32) {
    %c0_i32 = arith.constant 0 : i32
    %c0_i32_0 = arith.constant 0 : i32
    %c0_i32_1 = arith.constant 0 : i32
    return %c0_i32, %c0_i32_0 : i32, i32
  }
  func.func @transform_3(%arg0: i32) -> (i32, i32) {
    %c0_i32 = arith.constant 0 : i32
    %c0_i32_0 = arith.constant 0 : i32
    return %arg0, %c0_i32 : i32, i32
  }
  func.func @transform_4(%arg0: i32) -> (i32, i32, i32) {
    %c0_i32 = arith.constant 0 : i32
    %c0_i32_0 = arith.constant 0 : i32
    %c0_i32_1 = arith.constant 0 : i32
    return %arg0, %c0_i32, %c0_i32_0 : i32, i32, i32
  }
}

module attributes {stable_mosaic.version = 11 : i64} {
  func.func @_conv_stage_kernel(%arg0: i32, %arg1: memref<24x128xbf16, #tpu.memory_space<vmem>>, %arg2: memref<3x128x128xbf16, #tpu.memory_space<vmem>>, %arg3: memref<1x128xf32, #tpu.memory_space<vmem>>, %arg4: memref<1x128xf32, #tpu.memory_space<vmem>>, %arg5: memref<1x128xf32, #tpu.memory_space<vmem>>, %arg6: memref<16x128xbf16, #tpu.memory_space<vmem>>, %arg7: memref<1x2x128xf32, #tpu.memory_space<vmem>>, %arg8: memref<24x128xbf16, #tpu.memory_space<vmem>>) attributes {dimension_semantics = [#tpu.dimension_semantics<parallel>], iteration_bounds = array<i64: 2>, scalar_prefetch = 0 : i64, scratch_operands = 1 : i64, tpu.core_type = #tpu.core_type<tc>, window_params = [{transform_indices = @transform_0, window_bounds = array<i64: 24, 128>}, {pipeline_mode = #tpu.pipeline_mode<synchronous>, transform_indices = @transform_1, window_bounds = array<i64: 3, 128, 128>}, {pipeline_mode = #tpu.pipeline_mode<synchronous>, transform_indices = @transform_2, window_bounds = array<i64: 1, 128>}, {pipeline_mode = #tpu.pipeline_mode<synchronous>, transform_indices = @transform_3, window_bounds = array<i64: 1, 128>}, {pipeline_mode = #tpu.pipeline_mode<synchronous>, transform_indices = @transform_4, window_bounds = array<i64: 1, 128>}, {transform_indices = @transform_5, window_bounds = array<i64: 16, 128>}, {transform_indices = @transform_6, window_bounds = array<i64: 1, 2, 128>}]} {
    %c0 = arith.constant 0 : index
    %c0_0 = arith.constant 0 : index
    %0 = vector.load %arg3[%c0, %c0_0] : memref<1x128xf32, #tpu.memory_space<vmem>>, vector<1x128xf32>
    %cst = arith.constant 0.000000e+00 : bf16
    %1 = vector.broadcast %cst : bf16 to vector<24x128xbf16>
    %c0_1 = arith.constant 0 : index
    %c0_2 = arith.constant 0 : index
    %2 = vector.load %arg8[%c0_1, %c0_2] : memref<24x128xbf16, #tpu.memory_space<vmem>>, vector<24x128xbf16>
    tpu.vector_store %arg8[%c0_1, %c0_2], %1 {strides = array<i32>} : memref<24x128xbf16, #tpu.memory_space<vmem>>, vector<24x128xbf16>,
    %c0_3 = arith.constant 0 : index
    %c0_4 = arith.constant 0 : index
    %3 = vector.load %arg4[%c0_3, %c0_4] : memref<1x128xf32, #tpu.memory_space<vmem>>, vector<1x128xf32>
    %c0_5 = arith.constant 0 : index
    %c0_6 = arith.constant 0 : index
    %4 = vector.load %arg5[%c0_5, %c0_6] : memref<1x128xf32, #tpu.memory_space<vmem>>, vector<1x128xf32>
    %c1 = arith.constant 1 : index
    %c0_7 = arith.constant 0 : index
    %5 = vector.load %arg1[%c1, %c0_7] : memref<24x128xbf16, #tpu.memory_space<vmem>>, vector<16x128xbf16>
    %6 = arith.extf %5 : vector<16x128xbf16> to vector<16x128xf32>
    %7 = vector.broadcast %3 : vector<1x128xf32> to vector<16x128xf32>
    %8 = arith.mulf %6, %7 : vector<16x128xf32>
    %9 = vector.broadcast %4 : vector<1x128xf32> to vector<16x128xf32>
    %10 = arith.addf %8, %9 : vector<16x128xf32>
    %11 = arith.truncf %10 : vector<16x128xf32> to vector<16x128xbf16>
    %c1_8 = arith.constant 1 : index
    %c0_9 = arith.constant 0 : index
    %12 = vector.load %arg8[%c1_8, %c0_9] : memref<24x128xbf16, #tpu.memory_space<vmem>>, vector<16x128xbf16>
    tpu.vector_store %arg8[%c1_8, %c0_9], %11 {strides = array<i32>} : memref<24x128xbf16, #tpu.memory_space<vmem>>, vector<16x128xbf16>,
    %cst_10 = arith.constant 0.000000e+00 : f32
    %13 = vector.broadcast %cst_10 : f32 to vector<1x128xf32>
    %cst_11 = arith.constant 0.000000e+00 : f32
    %14 = vector.broadcast %cst_11 : f32 to vector<1x128xf32>
    %cst_12 = arith.constant 0.000000e+00 : f32
    %15 = vector.broadcast %cst_12 : f32 to vector<16x128xf32>
    %c0_13 = arith.constant 0 : index
    %c0_14 = arith.constant 0 : index
    %16 = vector.load %arg8[%c0_13, %c0_14] : memref<24x128xbf16, #tpu.memory_space<vmem>>, vector<16x128xbf16>
    %c0_15 = arith.constant 0 : index
    %c0_16 = arith.constant 0 : index
    %c0_17 = arith.constant 0 : index
    %17 = vector.load %arg2[%c0_15, %c0_16, %c0_17] : memref<3x128x128xbf16, #tpu.memory_space<vmem>>, vector<1x128x128xbf16>
    %18 = vector.shape_cast %17 : vector<1x128x128xbf16> to vector<128x128xbf16>
    %cst_18 = arith.constant dense<0.000000e+00> : vector<16x128xf32>
    %19 = tpu.matmul %16, %18, %cst_18 {dimension_numbers = #tpu.dot_dimension_numbers<[1], [0], [0], [1], [0, 0, 1, 1], [], []>} : vector<16x128xbf16>, vector<128x128xbf16>, vector<16x128xf32> -> vector<16x128xf32>
    %20 = arith.addf %15, %19 : vector<16x128xf32>
    %c1_19 = arith.constant 1 : index
    %c0_20 = arith.constant 0 : index
    %21 = vector.load %arg8[%c1_19, %c0_20] : memref<24x128xbf16, #tpu.memory_space<vmem>>, vector<16x128xbf16>
    %c1_21 = arith.constant 1 : index
    %c0_22 = arith.constant 0 : index
    %c0_23 = arith.constant 0 : index
    %22 = vector.load %arg2[%c1_21, %c0_22, %c0_23] : memref<3x128x128xbf16, #tpu.memory_space<vmem>>, vector<1x128x128xbf16>
    %23 = vector.shape_cast %22 : vector<1x128x128xbf16> to vector<128x128xbf16>
    %cst_24 = arith.constant dense<0.000000e+00> : vector<16x128xf32>
    %24 = tpu.matmul %21, %23, %cst_24 {dimension_numbers = #tpu.dot_dimension_numbers<[1], [0], [0], [1], [0, 0, 1, 1], [], []>} : vector<16x128xbf16>, vector<128x128xbf16>, vector<16x128xf32> -> vector<16x128xf32>
    %25 = arith.addf %20, %24 : vector<16x128xf32>
    %c2 = arith.constant 2 : index
    %c0_25 = arith.constant 0 : index
    %26 = vector.load %arg8[%c2, %c0_25] : memref<24x128xbf16, #tpu.memory_space<vmem>>, vector<16x128xbf16>
    %c2_26 = arith.constant 2 : index
    %c0_27 = arith.constant 0 : index
    %c0_28 = arith.constant 0 : index
    %27 = vector.load %arg2[%c2_26, %c0_27, %c0_28] : memref<3x128x128xbf16, #tpu.memory_space<vmem>>, vector<1x128x128xbf16>
    %28 = vector.shape_cast %27 : vector<1x128x128xbf16> to vector<128x128xbf16>
    %cst_29 = arith.constant dense<0.000000e+00> : vector<16x128xf32>
    %29 = tpu.matmul %26, %28, %cst_29 {dimension_numbers = #tpu.dot_dimension_numbers<[1], [0], [0], [1], [0, 0, 1, 1], [], []>} : vector<16x128xbf16>, vector<128x128xbf16>, vector<16x128xf32> -> vector<16x128xf32>
    %30 = arith.addf %25, %29 : vector<16x128xf32>
    %31 = vector.broadcast %0 : vector<1x128xf32> to vector<16x128xf32>
    %32 = arith.addf %30, %31 : vector<16x128xf32>
    %cst_30 = arith.constant 0.000000e+00 : f32
    %33 = vector.broadcast %cst_30 : f32 to vector<16x128xf32>
    %34 = arith.maximumf %32, %33 : vector<16x128xf32>
    %35 = arith.truncf %34 : vector<16x128xf32> to vector<16x128xbf16>
    %36 = arith.extf %35 : vector<16x128xbf16> to vector<16x128xf32>
    %cst_31 = arith.constant dense<0.000000e+00> : vector<128xf32>
    %37 = vector.multi_reduction <add>, %36, %cst_31 [0] : vector<16x128xf32> to vector<128xf32>
    %38 = vector.shape_cast %37 : vector<128xf32> to vector<1x128xf32>
    %39 = arith.addf %13, %38 : vector<1x128xf32>
    %40 = arith.mulf %36, %36 : vector<16x128xf32>
    %cst_32 = arith.constant dense<0.000000e+00> : vector<128xf32>
    %41 = vector.multi_reduction <add>, %40, %cst_32 [0] : vector<16x128xf32> to vector<128xf32>
    %42 = vector.shape_cast %41 : vector<128xf32> to vector<1x128xf32>
    %43 = arith.addf %14, %42 : vector<1x128xf32>
    %c0_33 = arith.constant 0 : index
    %c0_34 = arith.constant 0 : index
    %44 = vector.load %arg6[%c0_33, %c0_34] : memref<16x128xbf16, #tpu.memory_space<vmem>>, vector<16x128xbf16>
    tpu.vector_store %arg6[%c0_33, %c0_34], %35 {strides = array<i32>} : memref<16x128xbf16, #tpu.memory_space<vmem>>, vector<16x128xbf16>,
    %45 = tpu.concatenate %39, %43 in 0 : vector<1x128xf32>, vector<1x128xf32> -> vector<2x128xf32>
    %46 = vector.shape_cast %45 : vector<2x128xf32> to vector<1x2x128xf32>
    %c0_35 = arith.constant 0 : index
    %c0_36 = arith.constant 0 : index
    %c0_37 = arith.constant 0 : index
    %47 = vector.load %arg7[%c0_35, %c0_36, %c0_37] : memref<1x2x128xf32, #tpu.memory_space<vmem>>, vector<1x2x128xf32>
    tpu.vector_store %arg7[%c0_35, %c0_36, %c0_37], %46 {strides = array<i32>} : memref<1x2x128xf32, #tpu.memory_space<vmem>>, vector<1x2x128xf32>,
    return
  }
  func.func @transform_0(%arg0: i32) -> (i32, i32) {
    %c0_i32 = arith.constant 0 : i32
    %c0_i32_0 = arith.constant 0 : i32
    return %arg0, %c0_i32 : i32, i32
  }
  func.func @transform_1(%arg0: i32) -> (i32, i32, i32) {
    %c0_i32 = arith.constant 0 : i32
    %c0_i32_0 = arith.constant 0 : i32
    %c0_i32_1 = arith.constant 0 : i32
    %c0_i32_2 = arith.constant 0 : i32
    return %c0_i32, %c0_i32_0, %c0_i32_1 : i32, i32, i32
  }
  func.func @transform_2(%arg0: i32) -> (i32, i32) {
    %c0_i32 = arith.constant 0 : i32
    %c0_i32_0 = arith.constant 0 : i32
    %c0_i32_1 = arith.constant 0 : i32
    return %c0_i32, %c0_i32_0 : i32, i32
  }
  func.func @transform_3(%arg0: i32) -> (i32, i32) {
    %c0_i32 = arith.constant 0 : i32
    %c0_i32_0 = arith.constant 0 : i32
    %c0_i32_1 = arith.constant 0 : i32
    return %c0_i32, %c0_i32_0 : i32, i32
  }
  func.func @transform_4(%arg0: i32) -> (i32, i32) {
    %c0_i32 = arith.constant 0 : i32
    %c0_i32_0 = arith.constant 0 : i32
    %c0_i32_1 = arith.constant 0 : i32
    return %c0_i32, %c0_i32_0 : i32, i32
  }
  func.func @transform_5(%arg0: i32) -> (i32, i32) {
    %c0_i32 = arith.constant 0 : i32
    %c0_i32_0 = arith.constant 0 : i32
    return %arg0, %c0_i32 : i32, i32
  }
  func.func @transform_6(%arg0: i32) -> (i32, i32, i32) {
    %c0_i32 = arith.constant 0 : i32
    %c0_i32_0 = arith.constant 0 : i32
    %c0_i32_1 = arith.constant 0 : i32
    return %arg0, %c0_i32, %c0_i32_0 : i32, i32, i32
  }
}

module attributes {stable_mosaic.version = 11 : i64} {
  func.func @_bn_apply_kernel(%arg0: i32, %arg1: memref<16x128xbf16, #tpu.memory_space<vmem>>, %arg2: memref<1x128xf32, #tpu.memory_space<vmem>>, %arg3: memref<1x128xf32, #tpu.memory_space<vmem>>, %arg4: memref<16x128xf32, #tpu.memory_space<vmem>>) attributes {dimension_semantics = [#tpu.dimension_semantics<parallel>], iteration_bounds = array<i64: 2>, scalar_prefetch = 0 : i64, scratch_operands = 0 : i64, tpu.core_type = #tpu.core_type<tc>, window_params = [{transform_indices = @transform_0, window_bounds = array<i64: 16, 128>}, {pipeline_mode = #tpu.pipeline_mode<synchronous>, transform_indices = @transform_1, window_bounds = array<i64: 1, 128>}, {pipeline_mode = #tpu.pipeline_mode<synchronous>, transform_indices = @transform_2, window_bounds = array<i64: 1, 128>}, {transform_indices = @transform_3, window_bounds = array<i64: 16, 128>}]} {
    %c0 = arith.constant 0 : index
    %c0_0 = arith.constant 0 : index
    %0 = vector.load %arg1[%c0, %c0_0] : memref<16x128xbf16, #tpu.memory_space<vmem>>, vector<16x128xbf16>
    %1 = arith.extf %0 : vector<16x128xbf16> to vector<16x128xf32>
    %c0_1 = arith.constant 0 : index
    %c0_2 = arith.constant 0 : index
    %2 = vector.load %arg2[%c0_1, %c0_2] : memref<1x128xf32, #tpu.memory_space<vmem>>, vector<1x128xf32>
    %3 = vector.broadcast %2 : vector<1x128xf32> to vector<16x128xf32>
    %4 = arith.mulf %1, %3 : vector<16x128xf32>
    %c0_3 = arith.constant 0 : index
    %c0_4 = arith.constant 0 : index
    %5 = vector.load %arg3[%c0_3, %c0_4] : memref<1x128xf32, #tpu.memory_space<vmem>>, vector<1x128xf32>
    %6 = vector.broadcast %5 : vector<1x128xf32> to vector<16x128xf32>
    %7 = arith.addf %4, %6 : vector<16x128xf32>
    %c0_5 = arith.constant 0 : index
    %c0_6 = arith.constant 0 : index
    %8 = vector.load %arg4[%c0_5, %c0_6] : memref<16x128xf32, #tpu.memory_space<vmem>>, vector<16x128xf32>
    tpu.vector_store %arg4[%c0_5, %c0_6], %7 {strides = array<i32>} : memref<16x128xf32, #tpu.memory_space<vmem>>, vector<16x128xf32>,
    return
  }
  func.func @transform_0(%arg0: i32) -> (i32, i32) {
    %c0_i32 = arith.constant 0 : i32
    %c0_i32_0 = arith.constant 0 : i32
    return %arg0, %c0_i32 : i32, i32
  }
  func.func @transform_1(%arg0: i32) -> (i32, i32) {
    %c0_i32 = arith.constant 0 : i32
    %c0_i32_0 = arith.constant 0 : i32
    %c0_i32_1 = arith.constant 0 : i32
    return %c0_i32, %c0_i32_0 : i32, i32
  }
  func.func @transform_2(%arg0: i32) -> (i32, i32) {
    %c0_i32 = arith.constant 0 : i32
    %c0_i32_0 = arith.constant 0 : i32
    %c0_i32_1 = arith.constant 0 : i32
    return %c0_i32, %c0_i32_0 : i32, i32
  }
  func.func @transform_3(%arg0: i32) -> (i32, i32) {
    %c0_i32 = arith.constant 0 : i32
    %c0_i32_0 = arith.constant 0 : i32
    return %arg0, %c0_i32 : i32, i32
  }
}

</mosaic_0001>

<llo_original>
// kernel: tile.33
$region0: #{tile.33}
  #allocation0 [shape = 's32[1]{0}', space=sflag, size = 0x4, scoped, tag = 'scoped memory for tile.33']
  %s0 = inlined_call_operand.vmem [shape: f32[8], index: 0, kind: input, shape index: {}]
  %s1 = inlined_call_operand.vmem [shape: f32[16,8], index: 1, kind: output, shape index: {}]
  // Predicated region
  $region2: #{tile.33} parent=0 // pred_check
    _
  $region3: #{tile.33} parent=0 // pred_check_branch
    %3 = sbr.rel (0) target = $region5
  $region4: #{tile.33} parent=0 // pred_region
    _
  $region5: #{tile.33} parent=0 // pred_fallthru
    _
  %v4 = vld [vmem:[%s0] ss:$0 sm:$0xff]
  %5 = vst [vmem:[%s1] sm:$0xff] %v4
  %s6 = scalar_lea.vmem %s1, 8
  %7 = vst [vmem:[%s6] sm:$0xff] %v4

// kernel: conv_block_forward.3
$region0: #{conv_block_forward.3}
  #allocation0 [shape = 'u32[]', space=smem, size = 0x4, offset = 0x4, fixed_abs, tag = 'smem constant byte address 0x4 - core index']
  #allocation1 [shape = 'u32[144,128]{1,0:T(1,128)}', space=vmem, size = 0x12000, scoped, tag = 'internal scratch']
  %s0 = inlined_call_operand.vmem [shape: bf16[48,128], index: 0, kind: input, shape index: {}]
  %s1 = inlined_call_operand.vmem [shape: bf16[3,128,128], index: 1, kind: input, shape index: {}]
  %s2 = inlined_call_operand.vmem [shape: f32[1,128], index: 2, kind: input, shape index: {}]
  %s3 = inlined_call_operand.vmem [shape: bf16[48,128], index: 3, kind: output, shape index: {0}]
  %s4 = inlined_call_operand.vmem [shape: f32[2,2,128], index: 4, kind: output, shape index: {1}]
  %5 = xla_tuple %s3, %s4
  %s6 = sld [smem:[#allocation0]]
  $region53: #{conv_block_forward.3} parent=0
    _
  %s8 = ssub.s32 1, %s6
  %s9 = scalar_select 0, %s8, %s6
  loop: start=0, step=1, limit=4
  $region2: #{conv_block_forward.3} parent=0 // loop_pre_header
    _
  $region3: #{conv_block_forward.3} parent=0 // loop_header
    %s11 = sphi 0, %s15
    %p12 = scmp.ge.s32.totalorder %s11, 4
    %s21 = sphi 0, %s23
    %s24 = sphi 0, %s21
    %s25 = sphi 0, %s24
    %s41 = sphi 0, %s25
    %s45 = sphi 0, %s45
    %s47 = sphi 0, %s45
    %s48 = sphi 0, %s47
    %s62 = sphi 0, %s48
    %s66 = sphi 0, %s66
    %s68 = sphi 0, %s66
    %s69 = sphi 0, %s68
    %s83 = sphi 0, %s69
    %s89 = sphi 0, %s91
    %s92 = sphi 0, %s89
    %s93 = sphi 0, %s92
    %s109 = sphi 0, %s93
    %s115 = sphi 0, %s117
    %s118 = sphi 0, %s115
    %s119 = sphi 0, %s118
    %s135 = sphi 0, %s119
  $region4: #{conv_block_forward.3} parent=0 // loop_header_branch
    %14 = sbr.rel (%p12) target = $region8
  $region5: #{conv_block_forward.3} parent=0 // loop_body
    %s16 = ssub.s32 %s11, 1
    %s17 = ssub.s32 %s11, 2
    %s18 = sadd.s32 %s11, 1
    %s19 = ssub.s32 %s11, %s18
    %p20 = scmp.eq.s32.totalorder %s19, 0
    %s22 = sadd.s32 %s21, 1
    %s23 = scalar_select %p20, %s21, %s22
    %p26 = pneg %p20
    %p27 = scmp.eq.s32.totalorder %s11, 1
    %p28 = por %p26, %p27
    %p29 = scmp.ne.s32.totalorder %s21, %s24
    %p30 = scmp.eq.s32.totalorder %s11, 0
    %p31 = por %p29, %p30
    %p32 = scmp.ne.s32.totalorder %s21, %s24
    %p33 = scmp.eq.s32.totalorder %s16, 1
    %p34 = por %p32, %p33
    %p35 = scmp.ne.s32.totalorder %s24, %s25
    %p36 = scmp.eq.s32.totalorder %s16, 0
    %p37 = por %p35, %p36
    %p38 = scmp.ne.s32.totalorder %s24, %s25
    %p39 = scmp.eq.s32.totalorder %s17, 1
    %p40 = por %p38, %p39
    %p42 = scmp.ne.s32.totalorder %s25, %s41
    %p43 = scmp.eq.s32.totalorder %s17, 0
    %p44 = por %p42, %p43
    %s46 = sadd.s32 %s45, 1
    %p49 = scmp.eq.s32.totalorder %s11, 1
    %p50 = scmp.ne.s32.totalorder %s45, %s47
    %p51 = scmp.eq.s32.totalorder %s11, 0
    %p52 = por %p50, %p51
    %p53 = scmp.ne.s32.totalorder %s45, %s47
    %p54 = scmp.eq.s32.totalorder %s16, 1
    %p55 = por %p53, %p54
    %p56 = scmp.ne.s32.totalorder %s47, %s48
    %p57 = scmp.eq.s32.totalorder %s16, 0
    %p58 = por %p56, %p57
    %p59 = scmp.ne.s32.totalorder %s47, %s48
    %p60 = scmp.eq.s32.totalorder %s17, 1
    %p61 = por %p59, %p60
    %p63 = scmp.ne.s32.totalorder %s48, %s62
    %p64 = scmp.eq.s32.totalorder %s17, 0
    %p65 = por %p63, %p64
    %s67 = sadd.s32 %s66, 1
    %p70 = scmp.eq.s32.totalorder %s11, 1
    %p71 = scmp.ne.s32.totalorder %s66, %s68
    %p72 = scmp.eq.s32.totalorder %s11, 0
    %p73 = por %p71, %p72
    %p74 = scmp.ne.s32.totalorder %s66, %s68
    %p75 = scmp.eq.s32.totalorder %s16, 1
    %p76 = por %p74, %p75
    %p77 = scmp.ne.s32.totalorder %s68, %s69
    %p78 = scmp.eq.s32.totalorder %s16, 0
    %p79 = por %p77, %p78
    %p80 = scmp.ne.s32.totalorder %s68, %s69
    %p81 = scmp.eq.s32.totalorder %s17, 1
    %p82 = por %p80, %p81
    %p84 = scmp.ne.s32.totalorder %s69, %s83
    %p85 = scmp.eq.s32.totalorder %s17, 0
    %p86 = por %p84, %p85
    %s87 = ssub.s32 %s11, %s18
    %p88 = scmp.eq.s32.totalorder %s87, 0
    %s90 = sadd.s32 %s89, 1
    %s91 = scalar_select %p88, %s89, %s90
    %p94 = pneg %p88
    %p95 = scmp.eq.s32.totalorder %s11, 1
    %p96 = por %p94, %p95
    %p97 = scmp.ne.s32.totalorder %s89, %s92
    %p98 = scmp.eq.s32.totalorder %s11, 0
    %p99 = por %p97, %p98
    %p100 = scmp.ne.s32.totalorder %s89, %s92
    %p101 = scmp.eq.s32.totalorder %s16, 1
    %p102 = por %p100, %p101
    %p103 = scmp.ne.s32.totalorder %s92, %s93
    %p104 = scmp.eq.s32.totalorder %s16, 0
    %p105 = por %p103, %p104
    %p106 = scmp.ne.s32.totalorder %s92, %s93
    %p107 = scmp.eq.s32.totalorder %s17, 1
    %p108 = por %p106, %p107
    %p110 = scmp.ne.s32.totalorder %s93, %s109
    %p111 = scmp.eq.s32.totalorder %s17, 0
    %p112 = por %p110, %p111
    %s113 = ssub.s32 %s11, %s18
    %p114 = scmp.eq.s32.totalorder %s113, 0
    %s116 = sadd.s32 %s115, 1
    %s117 = scalar_select %p114, %s115, %s116
    %p120 = pneg %p114
    %p121 = scmp.eq.s32.totalorder %s11, 1
    %p122 = por %p120, %p121
    %p123 = scmp.ne.s32.totalorder %s115, %s118
    %p124 = scmp.eq.s32.totalorder %s11, 0
    %p125 = por %p123, %p124
    %p126 = scmp.ne.s32.totalorder %s115, %s118
    %p127 = scmp.eq.s32.totalorder %s16, 1
    %p128 = por %p126, %p127
    %p129 = scmp.ne.s32.totalorder %s118, %s119
    %p130 = scmp.eq.s32.totalorder %s16, 0
    %p131 = por %p129, %p130
    %p132 = scmp.ne.s32.totalorder %s118, %s119
    %p133 = scmp.eq.s32.totalorder %s17, 1
    %p134 = por %p132, %p133
    %p136 = scmp.ne.s32.totalorder %s119, %s135
    %p137 = scmp.eq.s32.totalorder %s17, 0
    %p138 = por %p136, %p137
    %p139 = scmp.le.s32.totalorder 1, %s11
    %p140 = scmp.lt.s32.totalorder %s11, 3
    %p141 = pnand %p139, %p140
    %p142 = pneg %p141
    // Predicated region
    $region9: #{conv_block_forward.3} parent=5 // pred_check
      _
    $region10: #{conv_block_forward.3} parent=5 // pred_check_branch
      %144 = sbr.rel (%p141) target = $region12
    $region11: #{conv_block_forward.3} parent=5 // pred_region
      %s145 = ssub.s32 %s11, 1
      // Predicated region
      $region13: #{conv_block_forward.3} parent=11 // pred_check
        %p146 = pneg %p58
      $region14: #{conv_block_forward.3} parent=11 // pred_check_branch
        %148 = sbr.rel (%p146) target = $region16
      $region15: #{conv_block_forward.3} parent=11 // pred_region
        _
      $region16: #{conv_block_forward.3} parent=11 // pred_fallthru
        _
      // Predicated region
      $region17: #{conv_block_forward.3} parent=11 // pred_check
        %p149 = pneg %p79
      $region18: #{conv_block_forward.3} parent=11 // pred_check_branch
        %151 = sbr.rel (%p149) target = $region20
      $region19: #{conv_block_forward.3} parent=11 // pred_region
        _
      $region20: #{conv_block_forward.3} parent=11 // pred_fallthru
        _
    $region12: #{conv_block_forward.3} parent=5 // pred_fallthru
      _
    %p152 = scmp.lt.s32.totalorder %s11, 2
    // Predicated region
    $region21: #{conv_block_forward.3} parent=5 // pred_check
      %p153 = pneg %p152
    $region22: #{conv_block_forward.3} parent=5 // pred_check_branch
      %155 = sbr.rel (%p153) target = $region24
    $region23: #{conv_block_forward.3} parent=5 // pred_region
      // Predicated region
      $region25: #{conv_block_forward.3} parent=23 // pred_check
        %p156 = pneg %p31
      $region26: #{conv_block_forward.3} parent=23 // pred_check_branch
        %158 = sbr.rel (%p156) target = $region28
      $region27: #{conv_block_forward.3} parent=23 // pred_region
        %s159 = smul.u32 3, %s11
        %p160 = scmp.lt.s32.totalorder %s159, 5
        %s161 = scalar_select %p160, %s159, 5
        %s162 = smul.addr %s161, 4
        %s163 = scalar_lea.vmem %s0, %s162
        %s164 = smul.u32 3, %s11
      $region28: #{conv_block_forward.3} parent=23 // pred_fallthru
        _
    $region24: #{conv_block_forward.3} parent=5 // pred_fallthru
      _
    %p165 = scmp.le.s32.totalorder 1, %s11
    %p166 = scmp.lt.s32.totalorder %s11, 3
    %p167 = pnand %p165, %p166
    %p168 = pneg %p167
    // Predicated region
    $region29: #{conv_block_forward.3} parent=5 // pred_check
      _
    $region30: #{conv_block_forward.3} parent=5 // pred_check_branch
      %170 = sbr.rel (%p167) target = $region32
    $region31: #{conv_block_forward.3} parent=5 // pred_region
      %s171 = ssub.s32 %s11, 1
      %s172 = smul.u32 3, %s16
      %p173 = scmp.lt.s32.totalorder %s172, 5
      %s174 = scalar_select %p173, %s172, 5
      %s175 = smul.addr %s174, 4
      %s176 = scalar_lea.vmem %s0, %s175
      %p177 = pneg %p37
      %p178 = pneg %p34
      %p179 = pneg %p58
      %p180 = pneg %p55
      %p181 = pneg %p79
      %p182 = pneg %p76
      %p183 = pneg %p105
      %p184 = pneg %p102
      %s185 = smul.u32 3, %s16
      %p186 = scmp.lt.s32.totalorder %s185, 5
      %s187 = scalar_select %p186, %s185, 5
      %s188 = smul.addr %s187, 4
      %s189 = scalar_lea.vmem %s3, %s188
      %p190 = pneg %p131
      %p191 = pneg %p128
      %p192 = scmp.lt.s32.totalorder %s16, 1
      %s193 = scalar_select %p192, %s16, 1
      %s194 = smul.addr %s193, 2
      %s195 = scalar_lea.vmem %s4, %s194
      %s196 = smul.u32 3, %s16
      %p197 = scmp.lt.s32.totalorder %s196, 5
      %s198 = scalar_select %p197, %s196, 5
      %s199 = smul.addr %s198, 4
      %s200 = scalar_lea.vmem %s0, %s199
      %s201 = smul.u32 3, %s16
      %s202 = smul.u32 3, %s16
      %p203 = scmp.lt.s32.totalorder %s202, 5
      %s204 = scalar_select %p203, %s202, 5
      %s205 = smul.addr %s204, 4
      %s206 = scalar_lea.vmem %s3, %s205
      %s207 = smul.u32 3, %s16
      %p208 = scmp.lt.s32.totalorder %s16, 1
      %s209 = scalar_select %p208, %s16, 1
      %s210 = smul.addr %s209, 2
      %s211 = scalar_lea.vmem %s4, %s210
      %v213 = vld [vmem:[%s2] sm:$0x1]
      %v214 = vld [vmem:[%s200] sm:$0xf]
      %v215 = vld [vmem:[%s200 + $0x4] sm:$0xf]
      %v216 = vld [vmem:[%s1] sm:$0xf]
      %v217 = vld [vmem:[%s1 + $0x4] sm:$0xf]
      %v218 = vld [vmem:[%s1 + $0x8] sm:$0xf]
      %v219 = vld [vmem:[%s1 + $0xc] sm:$0xf]
      %v220 = vld [vmem:[%s1 + $0x10] sm:$0xf]
      %v221 = vld [vmem:[%s1 + $0x14] sm:$0xf]
      %v222 = vld [vmem:[%s1 + $0x18] sm:$0xf]
      %v223 = vld [vmem:[%s1 + $0x1c] sm:$0xf]
      %v224 = vld [vmem:[%s1 + $0x20] sm:$0xf]
      %v225 = vld [vmem:[%s1 + $0x24] sm:$0xf]
      %v226 = vld [vmem:[%s1 + $0x28] sm:$0xf]
      %v227 = vld [vmem:[%s1 + $0x2c] sm:$0xf]
      %v228 = vld [vmem:[%s1 + $0x30] sm:$0xf]
      %v229 = vld [vmem:[%s1 + $0x34] sm:$0xf]
      %v230 = vld [vmem:[%s1 + $0x38] sm:$0xf]
      %v231 = vld [vmem:[%s1 + $0x3c] sm:$0xf]
      %v232 = vld [vmem:[%s200] sm:$0xf]
      %v233 = vld [vmem:[%s200 + $0x4] sm:$0xf]
      %v234 = vld [vmem:[%s200 + $0x8] sm:$0x1]
      %s235 = scalar_lea.vmem %s1, 64
      %v236 = vld [vmem:[%s235] sm:$0xf]
      %v237 = vld [vmem:[%s235 + $0x4] sm:$0xf]
      %v238 = vld [vmem:[%s235 + $0x8] sm:$0xf]
      %v239 = vld [vmem:[%s235 + $0xc] sm:$0xf]
      %v240 = vld [vmem:[%s235 + $0x10] sm:$0xf]
      %v241 = vld [vmem:[%s235 + $0x14] sm:$0xf]
      %v242 = vld [vmem:[%s235 + $0x18] sm:$0xf]
      %v243 = vld [vmem:[%s235 + $0x1c] sm:$0xf]
      %v244 = vld [vmem:[%s235 + $0x20] sm:$0xf]
      %v245 = vld [vmem:[%s235 + $0x24] sm:$0xf]
      %v246 = vld [vmem:[%s235 + $0x28] sm:$0xf]
      %v247 = vld [vmem:[%s235 + $0x2c] sm:$0xf]
      %v248 = vld [vmem:[%s235 + $0x30] sm:$0xf]
      %v249 = vld [vmem:[%s235 + $0x34] sm:$0xf]
      %v250 = vld [vmem:[%s235 + $0x38] sm:$0xf]
      %v251 = vld [vmem:[%s235 + $0x3c] sm:$0xf]
      %v255 = vunpack.c.l.b16 %v232
      %v256 = vunpack.c.l.b16 %v233
      %v257 = vunpack.c.l.b16 %v234
      %v258 = vpack.c.b16 %v256, %v255
      %v259 = vpack.c.b16 %v257, %v257
      %vm260 = vsmask.f32 7424
      %v262 = vshrl.u32 %v258, 16
      %v264 = vshll.u32 %v258, 16
      %v266 = vrot.slane %v264, 1
      %v267 = vor.u32 %v262, %v266
      %v269 = vshll.u32 %v259, 16
      %v271 = vrot.slane %v269, 1
      %v272 = vsel %vm260, %v267, %v271
      %v290 = vunpack.c.l.b16 %v236
      %v291 = vunpack.c.l.b16 %v237
      %v292 = vunpack.c.l.b16 %v238
      %v293 = vunpack.c.l.b16 %v239
      %v294 = vunpack.c.l.b16 %v240
      %v295 = vunpack.c.l.b16 %v241
      %v296 = vunpack.c.l.b16 %v242
      %v297 = vunpack.c.l.b16 %v243
      %v298 = vunpack.c.l.b16 %v244
      %v299 = vunpack.c.l.b16 %v245
      %v300 = vunpack.c.l.b16 %v246
      %v301 = vunpack.c.l.b16 %v247
      %v302 = vunpack.c.l.b16 %v248
      %v303 = vunpack.c.l.b16 %v249
      %v304 = vunpack.c.l.b16 %v250
      %v305 = vunpack.c.l.b16 %v251
      %v306 = vpack.c.b16 %v291, %v290
      %v307 = vpack.c.b16 %v293, %v292
      %v308 = vpack.c.b16 %v295, %v294
      %v309 = vpack.c.b16 %v297, %v296
      %v310 = vpack.c.b16 %v299, %v298
      %v311 = vpack.c.b16 %v301, %v300
      %v312 = vpack.c.b16 %v303, %v302
      %v313 = vpack.c.b16 %v305, %v304
      %322 = vmatprep.subr.bf16.mxu0 0
      %323 = vmatpush1.bf16.msra.mxu0 %v306
      %324 = vmatprep.subr.bf16.mxu0 0
      %325 = vmatpush1.bf16.msra.mxu0 %v307
      %326 = vmatprep.subr.bf16.mxu0 0
      %327 = vmatpush1.bf16.msra.mxu0 %v308
      %328 = vmatprep.subr.bf16.mxu0 0
      %329 = vmatpush1.bf16.msra.mxu0 %v309
      %330 = vmatprep.subr.bf16.mxu0 0
      %331 = vmatpush1.bf16.msra.mxu0 %v310
      %332 = vmatprep.subr.bf16.mxu0 0
      %333 = vmatpush1.bf16.msra.mxu0 %v311
      %334 = vmatprep.subr.bf16.mxu0 0
      %335 = vmatpush1.bf16.msra.mxu0 %v312
      %336 = vmatprep.subr.bf16.mxu0 0
      %337 = vmatpush1.bf16.msra.mxu0 %v313
      %338 = vmatprep.subr.bf16.mxu0 0
      %339 = vmatpush1.bf16.msra.mxu0 0
      %340 = vmatprep.subr.bf16.mxu0 0
      %341 = vmatpush1.bf16.msra.mxu0 0
      %342 = vmatprep.subr.bf16.mxu0 0
      %343 = vmatpush1.bf16.msra.mxu0 0
      %344 = vmatprep.subr.bf16.mxu0 0
      %345 = vmatpush1.bf16.msra.mxu0 0
      %346 = vmatprep.subr.bf16.mxu0 0
      %347 = vmatpush1.bf16.msra.mxu0 0
      %348 = vmatprep.subr.bf16.mxu0 0
      %349 = vmatpush1.bf16.msra.mxu0 0
      %350 = vmatprep.subr.bf16.mxu0 0
      %351 = vmatpush1.bf16.msra.mxu0 0
      %352 = vmatprep.subr.bf16.mxu0 0
      %353 = vmatpush1.bf16.msra.mxu0 0
      %354 = vmatprep.mubr.bf16.mxu0 0
      %355 = vmatmul.mubr.bf16.gmra.mrb[0].mxu0 %v272
      %v356 = vpop.f32.mrb[0].mxu0
      %v357 = vadd.f32 0.0, %v356
      %v358 = vpop.f32.mrb[0].mxu0
      %v359 = vpop.f32.mrb[0].mxu0
      %v360 = vadd.f32 0.0, %v359
      %v361 = vpop.f32.mrb[0].mxu0
      %362 = vdwg.mxu0
      %v365 = vunpack.c.l.b16 %v214
      %v366 = vunpack.c.l.b16 %v215
      %v367 = vpack.c.b16 %v366, %v365
      %v385 = vunpack.c.l.b16 %v216
      %v386 = vunpack.c.l.b16 %v217
      %v387 = vunpack.c.l.b16 %v218
      %v388 = vunpack.c.l.b16 %v219
      %v389 = vunpack.c.l.b16 %v220
      %v390 = vunpack.c.l.b16 %v221
      %v391 = vunpack.c.l.b16 %v222
      %v392 = vunpack.c.l.b16 %v223
      %v393 = vunpack.c.l.b16 %v224
      %v394 = vunpack.c.l.b16 %v225
      %v395 = vunpack.c.l.b16 %v226
      %v396 = vunpack.c.l.b16 %v227
      %v397 = vunpack.c.l.b16 %v228
      %v398 = vunpack.c.l.b16 %v229
      %v399 = vunpack.c.l.b16 %v230
      %v400 = vunpack.c.l.b16 %v231
      %v401 = vpack.c.b16 %v386, %v385
      %v402 = vpack.c.b16 %v388, %v387
      %v403 = vpack.c.b16 %v390, %v389
      %v404 = vpack.c.b16 %v392, %v391
      %v405 = vpack.c.b16 %v394, %v393
      %v406 = vpack.c.b16 %v396, %v395
      %v407 = vpack.c.b16 %v398, %v397
      %v408 = vpack.c.b16 %v400, %v399
      %417 = vmatprep.subr.bf16.mxu0 0
      %418 = vmatpush1.bf16.msra.mxu0 %v401
      %419 = vmatprep.subr.bf16.mxu0 0
      %420 = vmatpush1.bf16.msra.mxu0 %v402
      %421 = vmatprep.subr.bf16.mxu0 0
      %422 = vmatpush1.bf16.msra.mxu0 %v403
      %423 = vmatprep.subr.bf16.mxu0 0
      %424 = vmatpush1.bf16.msra.mxu0 %v404
      %425 = vmatprep.subr.bf16.mxu0 0
      %426 = vmatpush1.bf16.msra.mxu0 %v405
      %427 = vmatprep.subr.bf16.mxu0 0
      %428 = vmatpush1.bf16.msra.mxu0 %v406
      %429 = vmatprep.subr.bf16.mxu0 0
      %430 = vmatpush1.bf16.msra.mxu0 %v407
      %431 = vmatprep.subr.bf16.mxu0 0
      %432 = vmatpush1.bf16.msra.mxu0 %v408
      %433 = vmatprep.subr.bf16.mxu0 0
      %434 = vmatpush1.bf16.msra.mxu0 0
      %435 = vmatprep.subr.bf16.mxu0 0
      %436 = vmatpush1.bf16.msra.mxu0 0
      %437 = vmatprep.subr.bf16.mxu0 0
      %438 = vmatpush1.bf16.msra.mxu0 0
      %439 = vmatprep.subr.bf16.mxu0 0
      %440 = vmatpush1.bf16.msra.mxu0 0
      %441 = vmatprep.subr.bf16.mxu0 0
      %442 = vmatpush1.bf16.msra.mxu0 0
      %443 = vmatprep.subr.bf16.mxu0 0
      %444 = vmatpush1.bf16.msra.mxu0 0
      %445 = vmatprep.subr.bf16.mxu0 0
      %446 = vmatpush1.bf16.msra.mxu0 0
      %447 = vmatprep.subr.bf16.mxu0 0
      %448 = vmatpush1.bf16.msra.mxu0 0
      %449 = vmatprep.mubr.bf16.mxu0 0
      %450 = vmatmul.mubr.bf16.gmra.mrb[0].mxu0 %v367
      %v451 = vpop.f32.mrb[0].mxu0
      %v452 = vadd.f32 %v357, %v451
      %v453 = vpop.f32.mrb[0].mxu0
      %v454 = vpop.f32.mrb[0].mxu0
      %v455 = vadd.f32 %v360, %v454
      %v456 = vpop.f32.mrb[0].mxu0
      %457 = vdwg.mxu0
      %v458 = vld [vmem:[%s200] sm:$0xe]
      %s459 = scalar_lea.vmem %s1, 128
      %v460 = vld [vmem:[%s459] sm:$0xf]
      %v461 = vld [vmem:[%s459 + $0x4] sm:$0xf]
      %v462 = vld [vmem:[%s459 + $0x8] sm:$0xf]
      %v463 = vld [vmem:[%s459 + $0xc] sm:$0xf]
      %v464 = vld [vmem:[%s459 + $0x10] sm:$0xf]
      %v465 = vld [vmem:[%s459 + $0x14] sm:$0xf]
      %v466 = vld [vmem:[%s459 + $0x18] sm:$0xf]
      %v467 = vld [vmem:[%s459 + $0x1c] sm:$0xf]
      %v468 = vld [vmem:[%s459 + $0x20] sm:$0xf]
      %v469 = vld [vmem:[%s459 + $0x24] sm:$0xf]
      %v470 = vld [vmem:[%s459 + $0x28] sm:$0xf]
      %v471 = vld [vmem:[%s459 + $0x2c] sm:$0xf]
      %v472 = vld [vmem:[%s459 + $0x30] sm:$0xf]
      %v473 = vld [vmem:[%s459 + $0x34] sm:$0xf]
      %v474 = vld [vmem:[%s459 + $0x38] sm:$0xf]
      %v475 = vld [vmem:[%s459 + $0x3c] sm:$0xf]
      %v477 = vunpack.c.l.b16 %v458
      %v478 = vpack.c.b16 %v256, %v477
      %vm479 = vcmask 1046528
      %v480 = vrot.slane %v478, 1
      %v481 = vrot.slane %v259, 1
      %v482 = vsel %vm479, %v480, %v481
      %v500 = vunpack.c.l.b16 %v460
      %v501 = vunpack.c.l.b16 %v461
      %v502 = vunpack.c.l.b16 %v462
      %v503 = vunpack.c.l.b16 %v463
      %v504 = vunpack.c.l.b16 %v464
      %v505 = vunpack.c.l.b16 %v465
      %v506 = vunpack.c.l.b16 %v466
      %v507 = vunpack.c.l.b16 %v467
      %v508 = vunpack.c.l.b16 %v468
      %v509 = vunpack.c.l.b16 %v469
      %v510 = vunpack.c.l.b16 %v470
      %v511 = vunpack.c.l.b16 %v471
      %v512 = vunpack.c.l.b16 %v472
      %v513 = vunpack.c.l.b16 %v473
      %v514 = vunpack.c.l.b16 %v474
      %v515 = vunpack.c.l.b16 %v475
      %v516 = vpack.c.b16 %v501, %v500
      %v517 = vpack.c.b16 %v503, %v502
      %v518 = vpack.c.b16 %v505, %v504
      %v519 = vpack.c.b16 %v507, %v506
      %v520 = vpack.c.b16 %v509, %v508
      %v521 = vpack.c.b16 %v511, %v510
      %v522 = vpack.c.b16 %v513, %v512
      %v523 = vpack.c.b16 %v515, %v514
      %532 = vmatprep.subr.bf16.mxu0 0
      %533 = vmatpush1.bf16.msra.mxu0 %v516
      %534 = vmatprep.subr.bf16.mxu0 0
      %535 = vmatpush1.bf16.msra.mxu0 %v517
      %536 = vmatprep.subr.bf16.mxu0 0
      %537 = vmatpush1.bf16.msra.mxu0 %v518
      %538 = vmatprep.subr.bf16.mxu0 0
      %539 = vmatpush1.bf16.msra.mxu0 %v519
      %540 = vmatprep.subr.bf16.mxu0 0
      %541 = vmatpush1.bf16.msra.mxu0 %v520
      %542 = vmatprep.subr.bf16.mxu0 0
      %543 = vmatpush1.bf16.msra.mxu0 %v521
      %544 = vmatprep.subr.bf16.mxu0 0
      %545 = vmatpush1.bf16.msra.mxu0 %v522
      %546 = vmatprep.subr.bf16.mxu0 0
      %547 = vmatpush1.bf16.msra.mxu0 %v523
      %548 = vmatprep.subr.bf16.mxu0 0
      %549 = vmatpush1.bf16.msra.mxu0 0
      %550 = vmatprep.subr.bf16.mxu0 0
      %551 = vmatpush1.bf16.msra.mxu0 0
      %552 = vmatprep.subr.bf16.mxu0 0
      %553 = vmatpush1.bf16.msra.mxu0 0
      %554 = vmatprep.subr.bf16.mxu0 0
      %555 = vmatpush1.bf16.msra.mxu0 0
      %556 = vmatprep.subr.bf16.mxu0 0
      %557 = vmatpush1.bf16.msra.mxu0 0
      %558 = vmatprep.subr.bf16.mxu0 0
      %559 = vmatpush1.bf16.msra.mxu0 0
      %560 = vmatprep.subr.bf16.mxu0 0
      %561 = vmatpush1.bf16.msra.mxu0 0
      %562 = vmatprep.subr.bf16.mxu0 0
      %563 = vmatpush1.bf16.msra.mxu0 0
      %564 = vmatprep.mubr.bf16.mxu0 0
      %565 = vmatmul.mubr.bf16.gmra.mrb[0].mxu0 %v482
      %v566 = vpop.f32.mrb[0].mxu0
      %v567 = vadd.f32 0.0, %v566
      %v568 = vpop.f32.mrb[0].mxu0
      %v569 = vpop.f32.mrb[0].mxu0
      %v570 = vadd.f32 0.0, %v569
      %v571 = vpop.f32.mrb[0].mxu0
      %572 = vdwg.mxu0
      %v573 = vadd.f32 %v452, %v567
      %v574 = vadd.f32 %v455, %v570
      %v576 = vlaneseq
      %v577 = vshrl.u32 %v576, 7
      %v578 = vsub.s32 0, %v577
      %v579 = vrot.slane %v213, %v578
      %v581 = vadd.f32 %v573, %v579
      %v582 = vadd.f32 %v574, %v579
      %v583 = vmax.f32 %v581, 0.0
      %v584 = vmax.f32 %v582, 0.0
      %v585 = vpack.c.bf16 %v584, %v583
      %v586 = vunpack.c.l.bf16 %v585
      %v587 = vunpack.c.h.bf16 %v585
      %v588 = vadd.f32 %v586, %v587
      %v589 = vrot.slane %v588, 4
      %v590 = vadd.f32 %v588, %v589
      %v591 = vrot.slane %v590, 2
      %v592 = vadd.f32 %v590, %v591
      %v593 = vrot.slane %v592, 1
      %v594 = vadd.f32 %v592, %v593
      %v595 = vadd.f32 %v594, 0.0
      %v596 = vmul.f32 %v586, %v586
      %v597 = vmul.f32 %v587, %v587
      %v598 = vadd.f32 %v596, %v597
      %v599 = vrot.slane %v598, 4
      %v600 = vadd.f32 %v598, %v599
      %v601 = vrot.slane %v600, 2
      %v602 = vadd.f32 %v600, %v601
      %v603 = vrot.slane %v602, 1
      %v604 = vadd.f32 %v602, %v603
      %v605 = vadd.f32 %v604, 0.0
      %vm606 = vcmask 1040384
      %vm607 = vsmask.f32 256
      %vm608 = vmand %vm606, %vm607
      %v609 = vld [vmem:[%s206] sm:$0x1]
      %v610 = vsel %vm608, 0, %v609
      %611 = vst [vmem:[%s206] sm:$0x1] %v610
      %v613 = vunpack.c.l.b16 %v585
      %v614 = vunpack.c.h.b16 %v585
      %v615 = vpack.c.b16 %v613, %v613
      %v616 = vpack.c.b16 %v614, %v614
      %vm617 = vsmask.f32 4368
      %vm618 = vmor %vm607, %vm617
      %v620 = vshrl.u32 %v615, 16
      %v622 = vrot.slane %v620, 7
      %v623 = vshll.u32 %v615, 16
      %v625 = vor.u32 %v622, %v623
      %v626 = vrot.slane %v622, 4
      %v628 = vshrl.u32 %v616, 16
      %v630 = vrot.slane %v628, 7
      %v631 = vshll.u32 %v616, 16
      %v633 = vor.u32 %v630, %v631
      %v634 = vsel %vm618, %v626, %v633
      %v635 = vrot.slane %v630, 4
      %vm639 = vcmask 1043456
      %vm640 = vsmask.f32 7938
      %vm641 = vmand %vm639, %vm640
      %v642 = vld [vmem:[%s206] sm:$0xf]
      %v643 = vsel %vm641, %v625, %v642
      %644 = vst [vmem:[%s206] sm:$0xf] %v643
      %645 = vst [vmem:[%s206 + $0x4] sm:$0xf] %v634
      %v646 = vld [vmem:[%s206 + $0x8] sm:$0x1]
      %v647 = vsel %vm608, %v635, %v646
      %648 = vst [vmem:[%s206 + $0x8] sm:$0x1] %v647
      %v649 = vld [vmem:[%s206 + $0x8] sm:$0xf]
      %v650 = vsel %vm641, 0, %v649
      %651 = vst [vmem:[%s206 + $0x8] sm:$0xf] %v650
      %vm652 = vcmask 1040384
      %v653 = vsel %vm652, %v595, %v605
      %654 = vst [vmem:[%s211] sm:$0x3] %v653
      %s655 = smul.u32 3, %s16
      %p656 = scmp.lt.s32.totalorder %s655, 5
      %s657 = scalar_select %p656, %s655, 5
      %s658 = smul.addr %s657, 4
      %s659 = scalar_lea.vmem %s3, %s658
      %p660 = scmp.lt.s32.totalorder %s16, 1
      %s661 = scalar_select %p660, %s16, 1
      %s662 = smul.addr %s661, 2
      %s663 = scalar_lea.vmem %s4, %s662
      // Predicated region
      $region33: #{conv_block_forward.3} parent=31 // pred_check
        %p664 = pneg %p102
      $region34: #{conv_block_forward.3} parent=31 // pred_check_branch
        %666 = sbr.rel (%p664) target = $region36
      $region35: #{conv_block_forward.3} parent=31 // pred_region
        %s667 = smul.u32 3, %s16
      $region36: #{conv_block_forward.3} parent=31 // pred_fallthru
        _
      // Predicated region
      $region37: #{conv_block_forward.3} parent=31 // pred_check
        %p668 = pneg %p128
      $region38: #{conv_block_forward.3} parent=31 // pred_check_branch
        %670 = sbr.rel (%p668) target = $region40
      $region39: #{conv_block_forward.3} parent=31 // pred_region
        _
      $region40: #{conv_block_forward.3} parent=31 // pred_fallthru
        _
    $region32: #{conv_block_forward.3} parent=5 // pred_fallthru
      _
    %p671 = scmp.le.s32.totalorder 2, %s11
    // Predicated region
    $region41: #{conv_block_forward.3} parent=5 // pred_check
      %p672 = pneg %p671
    $region42: #{conv_block_forward.3} parent=5 // pred_check_branch
      %674 = sbr.rel (%p672) target = $region44
    $region43: #{conv_block_forward.3} parent=5 // pred_region
      %s675 = ssub.s32 %s11, 2
      // Predicated region
      $region45: #{conv_block_forward.3} parent=43 // pred_check
        %p676 = pneg %p108
      $region46: #{conv_block_forward.3} parent=43 // pred_check_branch
        %678 = sbr.rel (%p676) target = $region48
      $region47: #{conv_block_forward.3} parent=43 // pred_region
        %s679 = smul.u32 3, %s17
        %p680 = scmp.lt.s32.totalorder %s679, 5
        %s681 = scalar_select %p680, %s679, 5
        %s682 = smul.addr %s681, 4
        %s683 = scalar_lea.vmem %s3, %s682
      $region48: #{conv_block_forward.3} parent=43 // pred_fallthru
        _
      // Predicated region
      $region49: #{conv_block_forward.3} parent=43 // pred_check
        %p684 = pneg %p134
      $region50: #{conv_block_forward.3} parent=43 // pred_check_branch
        %686 = sbr.rel (%p684) target = $region52
      $region51: #{conv_block_forward.3} parent=43 // pred_region
        %p687 = scmp.lt.s32.totalorder %s17, 1
        %s688 = scalar_select %p687, %s17, 1
        %s689 = smul.addr %s688, 2
        %s690 = scalar_lea.vmem %s4, %s689
      $region52: #{conv_block_forward.3} parent=43 // pred_fallthru
        _
    $region44: #{conv_block_forward.3} parent=5 // pred_fallthru
      _
  $region6: #{conv_block_forward.3} parent=0 // loop_footer
    %s15 = sadd.s32 1, %s11
  $region7: #{conv_block_forward.3} parent=0 // loop_footer_branch
    %10 = sbr.rel target = $region3
  $region8: #{conv_block_forward.3} parent=0 // loop_exit
    _

// kernel: conv_block_forward.4
$region0: #{conv_block_forward.4}
  #allocation0 [shape = 'u32[]', space=smem, size = 0x4, offset = 0x4, fixed_abs, tag = 'smem constant byte address 0x4 - core index']
  #allocation1 [shape = 'u32[144,128]{1,0:T(1,128)}', space=vmem, size = 0x12000, scoped, tag = 'internal scratch']
  #allocation2 [shape = 'bf16[24,128]{1,0:T(8,128)(2,1)}', space=vmem, size = 0x1800, scoped, tag = 'scratch operand']
  %s0 = inlined_call_operand.vmem [shape: bf16[48,128], index: 0, kind: input, shape index: {}]
  %s1 = inlined_call_operand.vmem [shape: bf16[3,128,128], index: 1, kind: input, shape index: {}]
  %s2 = inlined_call_operand.vmem [shape: f32[1,128], index: 2, kind: input, shape index: {}]
  %s3 = inlined_call_operand.vmem [shape: f32[1,128], index: 3, kind: input, shape index: {}]
  %s4 = inlined_call_operand.vmem [shape: f32[1,128], index: 4, kind: input, shape index: {}]
  %s5 = inlined_call_operand.vmem [shape: bf16[32,128], index: 5, kind: output, shape index: {0}]
  %s6 = inlined_call_operand.vmem [shape: f32[2,2,128], index: 6, kind: output, shape index: {1}]
  %7 = xla_tuple %s5, %s6
  %s8 = sld [smem:[#allocation0]]
  $region61: #{conv_block_forward.4} parent=0
    _
  %s10 = ssub.s32 1, %s8
  %s11 = scalar_select 0, %s10, %s8
  loop: start=0, step=1, limit=4
  $region2: #{conv_block_forward.4} parent=0 // loop_pre_header
    _
  $region3: #{conv_block_forward.4} parent=0 // loop_header
    %s13 = sphi 0, %s17
    %p14 = scmp.ge.s32.totalorder %s13, 4
    %s23 = sphi 0, %s25
    %s26 = sphi 0, %s23
    %s27 = sphi 0, %s26
    %s43 = sphi 0, %s27
    %s47 = sphi 0, %s47
    %s49 = sphi 0, %s47
    %s50 = sphi 0, %s49
    %s64 = sphi 0, %s50
    %s68 = sphi 0, %s68
    %s70 = sphi 0, %s68
    %s71 = sphi 0, %s70
    %s85 = sphi 0, %s71
    %s89 = sphi 0, %s89
    %s91 = sphi 0, %s89
    %s92 = sphi 0, %s91
    %s106 = sphi 0, %s92
    %s110 = sphi 0, %s110
    %s112 = sphi 0, %s110
    %s113 = sphi 0, %s112
    %s127 = sphi 0, %s113
    %s133 = sphi 0, %s135
    %s136 = sphi 0, %s133
    %s137 = sphi 0, %s136
    %s153 = sphi 0, %s137
    %s159 = sphi 0, %s161
    %s162 = sphi 0, %s159
    %s163 = sphi 0, %s162
    %s179 = sphi 0, %s163
  $region4: #{conv_block_forward.4} parent=0 // loop_header_branch
    %16 = sbr.rel (%p14) target = $region8
  $region5: #{conv_block_forward.4} parent=0 // loop_body
    %s18 = ssub.s32 %s13, 1
    %s19 = ssub.s32 %s13, 2
    %s20 = sadd.s32 %s13, 1
    %s21 = ssub.s32 %s13, %s20
    %p22 = scmp.eq.s32.totalorder %s21, 0
    %s24 = sadd.s32 %s23, 1
    %s25 = scalar_select %p22, %s23, %s24
    %p28 = pneg %p22
    %p29 = scmp.eq.s32.totalorder %s13, 1
    %p30 = por %p28, %p29
    %p31 = scmp.ne.s32.totalorder %s23, %s26
    %p32 = scmp.eq.s32.totalorder %s13, 0
    %p33 = por %p31, %p32
    %p34 = scmp.ne.s32.totalorder %s23, %s26
    %p35 = scmp.eq.s32.totalorder %s18, 1
    %p36 = por %p34, %p35
    %p37 = scmp.ne.s32.totalorder %s26, %s27
    %p38 = scmp.eq.s32.totalorder %s18, 0
    %p39 = por %p37, %p38
    %p40 = scmp.ne.s32.totalorder %s26, %s27
    %p41 = scmp.eq.s32.totalorder %s19, 1
    %p42 = por %p40, %p41
    %p44 = scmp.ne.s32.totalorder %s27, %s43
    %p45 = scmp.eq.s32.totalorder %s19, 0
    %p46 = por %p44, %p45
    %s48 = sadd.s32 %s47, 1
    %p51 = scmp.eq.s32.totalorder %s13, 1
    %p52 = scmp.ne.s32.totalorder %s47, %s49
    %p53 = scmp.eq.s32.totalorder %s13, 0
    %p54 = por %p52, %p53
    %p55 = scmp.ne.s32.totalorder %s47, %s49
    %p56 = scmp.eq.s32.totalorder %s18, 1
    %p57 = por %p55, %p56
    %p58 = scmp.ne.s32.totalorder %s49, %s50
    %p59 = scmp.eq.s32.totalorder %s18, 0
    %p60 = por %p58, %p59
    %p61 = scmp.ne.s32.totalorder %s49, %s50
    %p62 = scmp.eq.s32.totalorder %s19, 1
    %p63 = por %p61, %p62
    %p65 = scmp.ne.s32.totalorder %s50, %s64
    %p66 = scmp.eq.s32.totalorder %s19, 0
    %p67 = por %p65, %p66
    %s69 = sadd.s32 %s68, 1
    %p72 = scmp.eq.s32.totalorder %s13, 1
    %p73 = scmp.ne.s32.totalorder %s68, %s70
    %p74 = scmp.eq.s32.totalorder %s13, 0
    %p75 = por %p73, %p74
    %p76 = scmp.ne.s32.totalorder %s68, %s70
    %p77 = scmp.eq.s32.totalorder %s18, 1
    %p78 = por %p76, %p77
    %p79 = scmp.ne.s32.totalorder %s70, %s71
    %p80 = scmp.eq.s32.totalorder %s18, 0
    %p81 = por %p79, %p80
    %p82 = scmp.ne.s32.totalorder %s70, %s71
    %p83 = scmp.eq.s32.totalorder %s19, 1
    %p84 = por %p82, %p83
    %p86 = scmp.ne.s32.totalorder %s71, %s85
    %p87 = scmp.eq.s32.totalorder %s19, 0
    %p88 = por %p86, %p87
    %s90 = sadd.s32 %s89, 1
    %p93 = scmp.eq.s32.totalorder %s13, 1
    %p94 = scmp.ne.s32.totalorder %s89, %s91
    %p95 = scmp.eq.s32.totalorder %s13, 0
    %p96 = por %p94, %p95
    %p97 = scmp.ne.s32.totalorder %s89, %s91
    %p98 = scmp.eq.s32.totalorder %s18, 1
    %p99 = por %p97, %p98
    %p100 = scmp.ne.s32.totalorder %s91, %s92
    %p101 = scmp.eq.s32.totalorder %s18, 0
    %p102 = por %p100, %p101
    %p103 = scmp.ne.s32.totalorder %s91, %s92
    %p104 = scmp.eq.s32.totalorder %s19, 1
    %p105 = por %p103, %p104
    %p107 = scmp.ne.s32.totalorder %s92, %s106
    %p108 = scmp.eq.s32.totalorder %s19, 0
    %p109 = por %p107, %p108
    %s111 = sadd.s32 %s110, 1
    %p114 = scmp.eq.s32.totalorder %s13, 1
    %p115 = scmp.ne.s32.totalorder %s110, %s112
    %p116 = scmp.eq.s32.totalorder %s13, 0
    %p117 = por %p115, %p116
    %p118 = scmp.ne.s32.totalorder %s110, %s112
    %p119 = scmp.eq.s32.totalorder %s18, 1
    %p120 = por %p118, %p119
    %p121 = scmp.ne.s32.totalorder %s112, %s113
    %p122 = scmp.eq.s32.totalorder %s18, 0
    %p123 = por %p121, %p122
    %p124 = scmp.ne.s32.totalorder %s112, %s113
    %p125 = scmp.eq.s32.totalorder %s19, 1
    %p126 = por %p124, %p125
    %p128 = scmp.ne.s32.totalorder %s113, %s127
    %p129 = scmp.eq.s32.totalorder %s19, 0
    %p130 = por %p128, %p129
    %s131 = ssub.s32 %s13, %s20
    %p132 = scmp.eq.s32.totalorder %s131, 0
    %s134 = sadd.s32 %s133, 1
    %s135 = scalar_select %p132, %s133, %s134
    %p138 = pneg %p132
    %p139 = scmp.eq.s32.totalorder %s13, 1
    %p140 = por %p138, %p139
    %p141 = scmp.ne.s32.totalorder %s133, %s136
    %p142 = scmp.eq.s32.totalorder %s13, 0
    %p143 = por %p141, %p142
    %p144 = scmp.ne.s32.totalorder %s133, %s136
    %p145 = scmp.eq.s32.totalorder %s18, 1
    %p146 = por %p144, %p145
    %p147 = scmp.ne.s32.totalorder %s136, %s137
    %p148 = scmp.eq.s32.totalorder %s18, 0
    %p149 = por %p147, %p148
    %p150 = scmp.ne.s32.totalorder %s136, %s137
    %p151 = scmp.eq.s32.totalorder %s19, 1
    %p152 = por %p150, %p151
    %p154 = scmp.ne.s32.totalorder %s137, %s153
    %p155 = scmp.eq.s32.totalorder %s19, 0
    %p156 = por %p154, %p155
    %s157 = ssub.s32 %s13, %s20
    %p158 = scmp.eq.s32.totalorder %s157, 0
    %s160 = sadd.s32 %s159, 1
    %s161 = scalar_select %p158, %s159, %s160
    %p164 = pneg %p158
    %p165 = scmp.eq.s32.totalorder %s13, 1
    %p166 = por %p164, %p165
    %p167 = scmp.ne.s32.totalorder %s159, %s162
    %p168 = scmp.eq.s32.totalorder %s13, 0
    %p169 = por %p167, %p168
    %p170 = scmp.ne.s32.totalorder %s159, %s162
    %p171 = scmp.eq.s32.totalorder %s18, 1
    %p172 = por %p170, %p171
    %p173 = scmp.ne.s32.totalorder %s162, %s163
    %p174 = scmp.eq.s32.totalorder %s18, 0
    %p175 = por %p173, %p174
    %p176 = scmp.ne.s32.totalorder %s162, %s163
    %p177 = scmp.eq.s32.totalorder %s19, 1
    %p178 = por %p176, %p177
    %p180 = scmp.ne.s32.totalorder %s163, %s179
    %p181 = scmp.eq.s32.totalorder %s19, 0
    %p182 = por %p180, %p181
    %p183 = scmp.le.s32.totalorder 1, %s13
    %p184 = scmp.lt.s32.totalorder %s13, 3
    %p185 = pnand %p183, %p184
    %p186 = pneg %p185
    // Predicated region
    $region9: #{conv_block_forward.4} parent=5 // pred_check
      _
    $region10: #{conv_block_forward.4} parent=5 // pred_check_branch
      %188 = sbr.rel (%p185) target = $region12
    $region11: #{conv_block_forward.4} parent=5 // pred_region
      %s189 = ssub.s32 %s13, 1
      // Predicated region
      $region13: #{conv_block_forward.4} parent=11 // pred_check
        %p190 = pneg %p60
      $region14: #{conv_block_forward.4} parent=11 // pred_check_branch
        %192 = sbr.rel (%p190) target = $region16
      $region15: #{conv_block_forward.4} parent=11 // pred_region
        _
      $region16: #{conv_block_forward.4} parent=11 // pred_fallthru
        _
      // Predicated region
      $region17: #{conv_block_forward.4} parent=11 // pred_check
        %p193 = pneg %p81
      $region18: #{conv_block_forward.4} parent=11 // pred_check_branch
        %195 = sbr.rel (%p193) target = $region20
      $region19: #{conv_block_forward.4} parent=11 // pred_region
        _
      $region20: #{conv_block_forward.4} parent=11 // pred_fallthru
        _
      // Predicated region
      $region21: #{conv_block_forward.4} parent=11 // pred_check
        %p196 = pneg %p102
      $region22: #{conv_block_forward.4} parent=11 // pred_check_branch
        %198 = sbr.rel (%p196) target = $region24
      $region23: #{conv_block_forward.4} parent=11 // pred_region
        _
      $region24: #{conv_block_forward.4} parent=11 // pred_fallthru
        _
      // Predicated region
      $region25: #{conv_block_forward.4} parent=11 // pred_check
        %p199 = pneg %p123
      $region26: #{conv_block_forward.4} parent=11 // pred_check_branch
        %201 = sbr.rel (%p199) target = $region28
      $region27: #{conv_block_forward.4} parent=11 // pred_region
        _
      $region28: #{conv_block_forward.4} parent=11 // pred_fallthru
        _
    $region12: #{conv_block_forward.4} parent=5 // pred_fallthru
      _
    %p202 = scmp.lt.s32.totalorder %s13, 2
    // Predicated region
    $region29: #{conv_block_forward.4} parent=5 // pred_check
      %p203 = pneg %p202
    $region30: #{conv_block_forward.4} parent=5 // pred_check_branch
      %205 = sbr.rel (%p203) target = $region32
    $region31: #{conv_block_forward.4} parent=5 // pred_region
      // Predicated region
      $region33: #{conv_block_forward.4} parent=31 // pred_check
        %p206 = pneg %p33
      $region34: #{conv_block_forward.4} parent=31 // pred_check_branch
        %208 = sbr.rel (%p206) target = $region36
      $region35: #{conv_block_forward.4} parent=31 // pred_region
        %s209 = smul.u32 3, %s13
        %p210 = scmp.lt.s32.totalorder %s209, 5
        %s211 = scalar_select %p210, %s209, 5
        %s212 = smul.addr %s211, 4
        %s213 = scalar_lea.vmem %s0, %s212
        %s214 = smul.u32 3, %s13
      $region36: #{conv_block_forward.4} parent=31 // pred_fallthru
        _
    $region32: #{conv_block_forward.4} parent=5 // pred_fallthru
      _
    %p215 = scmp.le.s32.totalorder 1, %s13
    %p216 = scmp.lt.s32.totalorder %s13, 3
    %p217 = pnand %p215, %p216
    %p218 = pneg %p217
    // Predicated region
    $region37: #{conv_block_forward.4} parent=5 // pred_check
      _
    $region38: #{conv_block_forward.4} parent=5 // pred_check_branch
      %220 = sbr.rel (%p217) target = $region40
    $region39: #{conv_block_forward.4} parent=5 // pred_region
      %s221 = ssub.s32 %s13, 1
      %s222 = smul.u32 3, %s18
      %p223 = scmp.lt.s32.totalorder %s222, 5
      %s224 = scalar_select %p223, %s222, 5
      %s225 = smul.addr %s224, 4
      %s226 = scalar_lea.vmem %s0, %s225
      %p227 = pneg %p39
      %p228 = pneg %p36
      %p229 = pneg %p60
      %p230 = pneg %p57
      %p231 = pneg %p81
      %p232 = pneg %p78
      %p233 = pneg %p102
      %p234 = pneg %p99
      %p235 = pneg %p123
      %p236 = pneg %p120
      %p237 = pneg %p149
      %p238 = pneg %p146
      %s239 = smul.u32 2, %s18
      %p240 = scmp.lt.s32.totalorder %s239, 3
      %s241 = scalar_select %p240, %s239, 3
      %s242 = smul.addr %s241, 4
      %s243 = scalar_lea.vmem %s5, %s242
      %p244 = pneg %p175
      %p245 = pneg %p172
      %p246 = scmp.lt.s32.totalorder %s18, 1
      %s247 = scalar_select %p246, %s18, 1
      %s248 = smul.addr %s247, 2
      %s249 = scalar_lea.vmem %s6, %s248
      %s250 = smul.u32 3, %s18
      %p251 = scmp.lt.s32.totalorder %s250, 5
      %s252 = scalar_select %p251, %s250, 5
      %s253 = smul.addr %s252, 4
      %s254 = scalar_lea.vmem %s0, %s253
      %s255 = smul.u32 3, %s18
      %s256 = smul.u32 2, %s18
      %p257 = scmp.lt.s32.totalorder %s256, 3
      %s258 = scalar_select %p257, %s256, 3
      %s259 = smul.addr %s258, 4
      %s260 = scalar_lea.vmem %s5, %s259
      %s261 = smul.u32 2, %s18
      %p262 = scmp.lt.s32.totalorder %s18, 1
      %s263 = scalar_select %p262, %s18, 1
      %s264 = smul.addr %s263, 2
      %s265 = scalar_lea.vmem %s6, %s264
      %v267 = vld [vmem:[%s2] sm:$0x1]
      %268 = vst [vmem:[#allocation2] sm:$0xf] 0
      %269 = vst [vmem:[#allocation2 + $0x4] sm:$0xf] 0
      %270 = vst [vmem:[#allocation2 + $0x8] sm:$0xf] 0
      %v271 = vld [vmem:[%s3] sm:$0x1]
      %v272 = vld [vmem:[%s4] sm:$0x1]
      %v273 = vld [vmem:[%s254] sm:$0xf]
      %v274 = vld [vmem:[%s254 + $0x4] sm:$0xf]
      %v275 = vld [vmem:[%s254 + $0x8] sm:$0x1]
      %v276 = vunpack.c.l.bf16 %v273
      %v277 = vunpack.c.l.bf16 %v274
      %v278 = vunpack.c.l.bf16 %v275
      %v280 = vlaneseq
      %v281 = vshrl.u32 %v280, 7
      %v282 = vsub.s32 0, %v281
      %v283 = vrot.slane %v271, %v282
      %v285 = vmul.f32 %v276, %v283
      %v286 = vmul.f32 %v277, %v283
      %v287 = vmul.f32 %v278, %v283
      %v289 = vlaneseq
      %v290 = vshrl.u32 %v289, 7
      %v291 = vsub.s32 0, %v290
      %v292 = vrot.slane %v272, %v291
      %v294 = vadd.f32 %v285, %v292
      %v295 = vadd.f32 %v286, %v292
      %v296 = vadd.f32 %v287, %v292
      %v297 = vpack.c.bf16 %v295, %v294
      %v298 = vpack.c.bf16 %v296, %v296
      %v301 = vunpack.c.l.b16 %v297
      %v302 = vunpack.c.h.b16 %v297
      %v303 = vunpack.c.l.b16 %v298
      %v304 = vpack.c.b16 %v301, %v301
      %v305 = vpack.c.b16 %v302, %v302
      %v306 = vpack.c.b16 %v303, %v303
      %vm310 = vcmask 1043456
      %vm311 = vsmask.f32 7938
      %vm312 = vmand %vm310, %vm311
      %v313 = vld [vmem:[#allocation2] sm:$0xf]
      %v314 = vsel %vm312, %v304, %v313
      %315 = vst [vmem:[#allocation2] sm:$0xf] %v314
      %316 = vst [vmem:[#allocation2 + $0x4] sm:$0xf] %v305
      %vm317 = vcmask 1040384
      %vm318 = vsmask.f32 256
      %vm319 = vmand %vm317, %vm318
      %v320 = vld [vmem:[#allocation2 + $0x8] sm:$0x1]
      %v321 = vsel %vm319, %v306, %v320
      %322 = vst [vmem:[#allocation2 + $0x8] sm:$0x1] %v321
      %v323 = vld [vmem:[#allocation2] sm:$0xf]
      %v324 = vld [vmem:[#allocation2 + $0x4] sm:$0xf]
      %v325 = vld [vmem:[%s1] sm:$0xf]
      %v326 = vld [vmem:[%s1 + $0x4] sm:$0xf]
      %v327 = vld [vmem:[%s1 + $0x8] sm:$0xf]
      %v328 = vld [vmem:[%s1 + $0xc] sm:$0xf]
      %v329 = vld [vmem:[%s1 + $0x10] sm:$0xf]
      %v330 = vld [vmem:[%s1 + $0x14] sm:$0xf]
      %v331 = vld [vmem:[%s1 + $0x18] sm:$0xf]
      %v332 = vld [vmem:[%s1 + $0x1c] sm:$0xf]
      %v333 = vld [vmem:[%s1 + $0x20] sm:$0xf]
      %v334 = vld [vmem:[%s1 + $0x24] sm:$0xf]
      %v335 = vld [vmem:[%s1 + $0x28] sm:$0xf]
      %v336 = vld [vmem:[%s1 + $0x2c] sm:$0xf]
      %v337 = vld [vmem:[%s1 + $0x30] sm:$0xf]
      %v338 = vld [vmem:[%s1 + $0x34] sm:$0xf]
      %v339 = vld [vmem:[%s1 + $0x38] sm:$0xf]
      %v340 = vld [vmem:[%s1 + $0x3c] sm:$0xf]
      %v341 = vld [vmem:[#allocation2] sm:$0xf]
      %v342 = vld [vmem:[#allocation2 + $0x4] sm:$0xf]
      %v343 = vld [vmem:[#allocation2 + $0x8] sm:$0x1]
      %s344 = scalar_lea.vmem %s1, 64
      %v345 = vld [vmem:[%s344] sm:$0xf]
      %v346 = vld [vmem:[%s344 + $0x4] sm:$0xf]
      %v347 = vld [vmem:[%s344 + $0x8] sm:$0xf]
      %v348 = vld [vmem:[%s344 + $0xc] sm:$0xf]
      %v349 = vld [vmem:[%s344 + $0x10] sm:$0xf]
      %v350 = vld [vmem:[%s344 + $0x14] sm:$0xf]
      %v351 = vld [vmem:[%s344 + $0x18] sm:$0xf]
      %v352 = vld [vmem:[%s344 + $0x1c] sm:$0xf]
      %v353 = vld [vmem:[%s344 + $0x20] sm:$0xf]
      %v354 = vld [vmem:[%s344 + $0x24] sm:$0xf]
      %v355 = vld [vmem:[%s344 + $0x28] sm:$0xf]
      %v356 = vld [vmem:[%s344 + $0x2c] sm:$0xf]
      %v357 = vld [vmem:[%s344 + $0x30] sm:$0xf]
      %v358 = vld [vmem:[%s344 + $0x34] sm:$0xf]
      %v359 = vld [vmem:[%s344 + $0x38] sm:$0xf]
      %v360 = vld [vmem:[%s344 + $0x3c] sm:$0xf]
      %v364 = vunpack.c.l.b16 %v341
      %v365 = vunpack.c.l.b16 %v342
      %v366 = vunpack.c.l.b16 %v343
      %v367 = vpack.c.b16 %v365, %v364
      %v368 = vpack.c.b16 %v366, %v366
      %vm369 = vsmask.f32 7424
      %v371 = vshrl.u32 %v367, 16
      %v373 = vshll.u32 %v367, 16
      %v375 = vrot.slane %v373, 1
      %v376 = vor.u32 %v371, %v375
      %v378 = vshll.u32 %v368, 16
      %v380 = vrot.slane %v378, 1
      %v381 = vsel %vm369, %v376, %v380
      %v399 = vunpack.c.l.b16 %v345
      %v400 = vunpack.c.l.b16 %v346
      %v401 = vunpack.c.l.b16 %v347
      %v402 = vunpack.c.l.b16 %v348
      %v403 = vunpack.c.l.b16 %v349
      %v404 = vunpack.c.l.b16 %v350
      %v405 = vunpack.c.l.b16 %v351
      %v406 = vunpack.c.l.b16 %v352
      %v407 = vunpack.c.l.b16 %v353
      %v408 = vunpack.c.l.b16 %v354
      %v409 = vunpack.c.l.b16 %v355
      %v410 = vunpack.c.l.b16 %v356
      %v411 = vunpack.c.l.b16 %v357
      %v412 = vunpack.c.l.b16 %v358
      %v413 = vunpack.c.l.b16 %v359
      %v414 = vunpack.c.l.b16 %v360
      %v415 = vpack.c.b16 %v400, %v399
      %v416 = vpack.c.b16 %v402, %v401
      %v417 = vpack.c.b16 %v404, %v403
      %v418 = vpack.c.b16 %v406, %v405
      %v419 = vpack.c.b16 %v408, %v407
      %v420 = vpack.c.b16 %v410, %v409
      %v421 = vpack.c.b16 %v412, %v411
      %v422 = vpack.c.b16 %v414, %v413
      %431 = vmatprep.subr.bf16.mxu0 0
      %432 = vmatpush1.bf16.msra.mxu0 %v415
      %433 = vmatprep.subr.bf16.mxu0 0
      %434 = vmatpush1.bf16.msra.mxu0 %v416
      %435 = vmatprep.subr.bf16.mxu0 0
      %436 = vmatpush1.bf16.msra.mxu0 %v417
      %437 = vmatprep.subr.bf16.mxu0 0
      %438 = vmatpush1.bf16.msra.mxu0 %v418
      %439 = vmatprep.subr.bf16.mxu0 0
      %440 = vmatpush1.bf16.msra.mxu0 %v419
      %441 = vmatprep.subr.bf16.mxu0 0
      %442 = vmatpush1.bf16.msra.mxu0 %v420
      %443 = vmatprep.subr.bf16.mxu0 0
      %444 = vmatpush1.bf16.msra.mxu0 %v421
      %445 = vmatprep.subr.bf16.mxu0 0
      %446 = vmatpush1.bf16.msra.mxu0 %v422
      %447 = vmatprep.subr.bf16.mxu0 0
      %448 = vmatpush1.bf16.msra.mxu0 0
      %449 = vmatprep.subr.bf16.mxu0 0
      %450 = vmatpush1.bf16.msra.mxu0 0
      %451 = vmatprep.subr.bf16.mxu0 0
      %452 = vmatpush1.bf16.msra.mxu0 0
      %453 = vmatprep.subr.bf16.mxu0 0
      %454 = vmatpush1.bf16.msra.mxu0 0
      %455 = vmatprep.subr.bf16.mxu0 0
      %456 = vmatpush1.bf16.msra.mxu0 0
      %457 = vmatprep.subr.bf16.mxu0 0
      %458 = vmatpush1.bf16.msra.mxu0 0
      %459 = vmatprep.subr.bf16.mxu0 0
      %460 = vmatpush1.bf16.msra.mxu0 0
      %461 = vmatprep.subr.bf16.mxu0 0
      %462 = vmatpush1.bf16.msra.mxu0 0
      %463 = vmatprep.mubr.bf16.mxu0 0
      %464 = vmatmul.mubr.bf16.gmra.mrb[0].mxu0 %v381
      %v465 = vpop.f32.mrb[0].mxu0
      %v466 = vadd.f32 0.0, %v465
      %v467 = vpop.f32.mrb[0].mxu0
      %v468 = vpop.f32.mrb[0].mxu0
      %v469 = vadd.f32 0.0, %v468
      %v470 = vpop.f32.mrb[0].mxu0
      %471 = vdwg.mxu0
      %v474 = vunpack.c.l.b16 %v323
      %v475 = vunpack.c.l.b16 %v324
      %v476 = vpack.c.b16 %v475, %v474
      %v494 = vunpack.c.l.b16 %v325
      %v495 = vunpack.c.l.b16 %v326
      %v496 = vunpack.c.l.b16 %v327
      %v497 = vunpack.c.l.b16 %v328
      %v498 = vunpack.c.l.b16 %v329
      %v499 = vunpack.c.l.b16 %v330
      %v500 = vunpack.c.l.b16 %v331
      %v501 = vunpack.c.l.b16 %v332
      %v502 = vunpack.c.l.b16 %v333
      %v503 = vunpack.c.l.b16 %v334
      %v504 = vunpack.c.l.b16 %v335
      %v505 = vunpack.c.l.b16 %v336
      %v506 = vunpack.c.l.b16 %v337
      %v507 = vunpack.c.l.b16 %v338
      %v508 = vunpack.c.l.b16 %v339
      %v509 = vunpack.c.l.b16 %v340
      %v510 = vpack.c.b16 %v495, %v494
      %v511 = vpack.c.b16 %v497, %v496
      %v512 = vpack.c.b16 %v499, %v498
      %v513 = vpack.c.b16 %v501, %v500
      %v514 = vpack.c.b16 %v503, %v502
      %v515 = vpack.c.b16 %v505, %v504
      %v516 = vpack.c.b16 %v507, %v506
      %v517 = vpack.c.b16 %v509, %v508
      %526 = vmatprep.subr.bf16.mxu0 0
      %527 = vmatpush1.bf16.msra.mxu0 %v510
      %528 = vmatprep.subr.bf16.mxu0 0
      %529 = vmatpush1.bf16.msra.mxu0 %v511
      %530 = vmatprep.subr.bf16.mxu0 0
      %531 = vmatpush1.bf16.msra.mxu0 %v512
      %532 = vmatprep.subr.bf16.mxu0 0
      %533 = vmatpush1.bf16.msra.mxu0 %v513
      %534 = vmatprep.subr.bf16.mxu0 0
      %535 = vmatpush1.bf16.msra.mxu0 %v514
      %536 = vmatprep.subr.bf16.mxu0 0
      %537 = vmatpush1.bf16.msra.mxu0 %v515
      %538 = vmatprep.subr.bf16.mxu0 0
      %539 = vmatpush1.bf16.msra.mxu0 %v516
      %540 = vmatprep.subr.bf16.mxu0 0
      %541 = vmatpush1.bf16.msra.mxu0 %v517
      %542 = vmatprep.subr.bf16.mxu0 0
      %543 = vmatpush1.bf16.msra.mxu0 0
      %544 = vmatprep.subr.bf16.mxu0 0
      %545 = vmatpush1.bf16.msra.mxu0 0
      %546 = vmatprep.subr.bf16.mxu0 0
      %547 = vmatpush1.bf16.msra.mxu0 0
      %548 = vmatprep.subr.bf16.mxu0 0
      %549 = vmatpush1.bf16.msra.mxu0 0
      %550 = vmatprep.subr.bf16.mxu0 0
      %551 = vmatpush1.bf16.msra.mxu0 0
      %552 = vmatprep.subr.bf16.mxu0 0
      %553 = vmatpush1.bf16.msra.mxu0 0
      %554 = vmatprep.subr.bf16.mxu0 0
      %555 = vmatpush1.bf16.msra.mxu0 0
      %556 = vmatprep.subr.bf16.mxu0 0
      %557 = vmatpush1.bf16.msra.mxu0 0
      %558 = vmatprep.mubr.bf16.mxu0 0
      %559 = vmatmul.mubr.bf16.gmra.mrb[0].mxu0 %v476
      %v560 = vpop.f32.mrb[0].mxu0
      %v561 = vadd.f32 %v466, %v560
      %v562 = vpop.f32.mrb[0].mxu0
      %v563 = vpop.f32.mrb[0].mxu0
      %v564 = vadd.f32 %v469, %v563
      %v565 = vpop.f32.mrb[0].mxu0
      %566 = vdwg.mxu0
      %v567 = vld [vmem:[#allocation2] sm:$0xe]
      %s568 = scalar_lea.vmem %s1, 128
      %v569 = vld [vmem:[%s568] sm:$0xf]
      %v570 = vld [vmem:[%s568 + $0x4] sm:$0xf]
      %v571 = vld [vmem:[%s568 + $0x8] sm:$0xf]
      %v572 = vld [vmem:[%s568 + $0xc] sm:$0xf]
      %v573 = vld [vmem:[%s568 + $0x10] sm:$0xf]
      %v574 = vld [vmem:[%s568 + $0x14] sm:$0xf]
      %v575 = vld [vmem:[%s568 + $0x18] sm:$0xf]
      %v576 = vld [vmem:[%s568 + $0x1c] sm:$0xf]
      %v577 = vld [vmem:[%s568 + $0x20] sm:$0xf]
      %v578 = vld [vmem:[%s568 + $0x24] sm:$0xf]
      %v579 = vld [vmem:[%s568 + $0x28] sm:$0xf]
      %v580 = vld [vmem:[%s568 + $0x2c] sm:$0xf]
      %v581 = vld [vmem:[%s568 + $0x30] sm:$0xf]
      %v582 = vld [vmem:[%s568 + $0x34] sm:$0xf]
      %v583 = vld [vmem:[%s568 + $0x38] sm:$0xf]
      %v584 = vld [vmem:[%s568 + $0x3c] sm:$0xf]
      %v586 = vunpack.c.l.b16 %v567
      %v587 = vpack.c.b16 %v365, %v586
      %vm588 = vcmask 1046528
      %v589 = vrot.slane %v587, 1
      %v590 = vrot.slane %v368, 1
      %v591 = vsel %vm588, %v589, %v590
      %v609 = vunpack.c.l.b16 %v569
      %v610 = vunpack.c.l.b16 %v570
      %v611 = vunpack.c.l.b16 %v571
      %v612 = vunpack.c.l.b16 %v572
      %v613 = vunpack.c.l.b16 %v573
      %v614 = vunpack.c.l.b16 %v574
      %v615 = vunpack.c.l.b16 %v575
      %v616 = vunpack.c.l.b16 %v576
      %v617 = vunpack.c.l.b16 %v577
      %v618 = vunpack.c.l.b16 %v578
      %v619 = vunpack.c.l.b16 %v579
      %v620 = vunpack.c.l.b16 %v580
      %v621 = vunpack.c.l.b16 %v581
      %v622 = vunpack.c.l.b16 %v582
      %v623 = vunpack.c.l.b16 %v583
      %v624 = vunpack.c.l.b16 %v584
      %v625 = vpack.c.b16 %v610, %v609
      %v626 = vpack.c.b16 %v612, %v611
      %v627 = vpack.c.b16 %v614, %v613
      %v628 = vpack.c.b16 %v616, %v615
      %v629 = vpack.c.b16 %v618, %v617
      %v630 = vpack.c.b16 %v620, %v619
      %v631 = vpack.c.b16 %v622, %v621
      %v632 = vpack.c.b16 %v624, %v623
      %641 = vmatprep.subr.bf16.mxu0 0
      %642 = vmatpush1.bf16.msra.mxu0 %v625
      %643 = vmatprep.subr.bf16.mxu0 0
      %644 = vmatpush1.bf16.msra.mxu0 %v626
      %645 = vmatprep.subr.bf16.mxu0 0
      %646 = vmatpush1.bf16.msra.mxu0 %v627
      %647 = vmatprep.subr.bf16.mxu0 0
      %648 = vmatpush1.bf16.msra.mxu0 %v628
      %649 = vmatprep.subr.bf16.mxu0 0
      %650 = vmatpush1.bf16.msra.mxu0 %v629
      %651 = vmatprep.subr.bf16.mxu0 0
      %652 = vmatpush1.bf16.msra.mxu0 %v630
      %653 = vmatprep.subr.bf16.mxu0 0
      %654 = vmatpush1.bf16.msra.mxu0 %v631
      %655 = vmatprep.subr.bf16.mxu0 0
      %656 = vmatpush1.bf16.msra.mxu0 %v632
      %657 = vmatprep.subr.bf16.mxu0 0
      %658 = vmatpush1.bf16.msra.mxu0 0
      %659 = vmatprep.subr.bf16.mxu0 0
      %660 = vmatpush1.bf16.msra.mxu0 0
      %661 = vmatprep.subr.bf16.mxu0 0
      %662 = vmatpush1.bf16.msra.mxu0 0
      %663 = vmatprep.subr.bf16.mxu0 0
      %664 = vmatpush1.bf16.msra.mxu0 0
      %665 = vmatprep.subr.bf16.mxu0 0
      %666 = vmatpush1.bf16.msra.mxu0 0
      %667 = vmatprep.subr.bf16.mxu0 0
      %668 = vmatpush1.bf16.msra.mxu0 0
      %669 = vmatprep.subr.bf16.mxu0 0
      %670 = vmatpush1.bf16.msra.mxu0 0
      %671 = vmatprep.subr.bf16.mxu0 0
      %672 = vmatpush1.bf16.msra.mxu0 0
      %673 = vmatprep.mubr.bf16.mxu0 0
      %674 = vmatmul.mubr.bf16.gmra.mrb[0].mxu0 %v591
      %v675 = vpop.f32.mrb[0].mxu0
      %v676 = vadd.f32 0.0, %v675
      %v677 = vpop.f32.mrb[0].mxu0
      %v678 = vpop.f32.mrb[0].mxu0
      %v679 = vadd.f32 0.0, %v678
      %v680 = vpop.f32.mrb[0].mxu0
      %681 = vdwg.mxu0
      %v682 = vadd.f32 %v561, %v676
      %v683 = vadd.f32 %v564, %v679
      %v685 = vlaneseq
      %v686 = vshrl.u32 %v685, 7
      %v687 = vsub.s32 0, %v686
      %v688 = vrot.slane %v267, %v687
      %v690 = vadd.f32 %v682, %v688
      %v691 = vadd.f32 %v683, %v688
      %v692 = vmax.f32 %v690, 0.0
      %v693 = vmax.f32 %v691, 0.0
      %v694 = vpack.c.bf16 %v693, %v692
      %v695 = vunpack.c.l.bf16 %v694
      %v696 = vunpack.c.h.bf16 %v694
      %v697 = vadd.f32 %v695, %v696
      %v698 = vrot.slane %v697, 4
      %v699 = vadd.f32 %v697, %v698
      %v700 = vrot.slane %v699, 2
      %v701 = vadd.f32 %v699, %v700
      %v702 = vrot.slane %v701, 1
      %v703 = vadd.f32 %v701, %v702
      %v704 = vadd.f32 %v703, 0.0
      %v705 = vmul.f32 %v695, %v695
      %v706 = vmul.f32 %v696, %v696
      %v707 = vadd.f32 %v705, %v706
      %v708 = vrot.slane %v707, 4
      %v709 = vadd.f32 %v707, %v708
      %v710 = vrot.slane %v709, 2
      %v711 = vadd.f32 %v709, %v710
      %v712 = vrot.slane %v711, 1
      %v713 = vadd.f32 %v711, %v712
      %v714 = vadd.f32 %v713, 0.0
      %v716 = vunpack.c.l.b16 %v694
      %v717 = vunpack.c.h.b16 %v694
      %v718 = vpack.c.b16 %v716, %v716
      %v719 = vpack.c.b16 %v717, %v717
      %722 = vst [vmem:[%s260] sm:$0xf] %v718
      %723 = vst [vmem:[%s260 + $0x4] sm:$0xf] %v719
      %vm724 = vcmask 1040384
      %v725 = vsel %vm724, %v704, %v714
      %726 = vst [vmem:[%s265] sm:$0x3] %v725
      %s727 = smul.u32 2, %s18
      %p728 = scmp.lt.s32.totalorder %s727, 3
      %s729 = scalar_select %p728, %s727, 3
      %s730 = smul.addr %s729, 4
      %s731 = scalar_lea.vmem %s5, %s730
      %p732 = scmp.lt.s32.totalorder %s18, 1
      %s733 = scalar_select %p732, %s18, 1
      %s734 = smul.addr %s733, 2
      %s735 = scalar_lea.vmem %s6, %s734
      // Predicated region
      $region41: #{conv_block_forward.4} parent=39 // pred_check
        %p736 = pneg %p146
      $region42: #{conv_block_forward.4} parent=39 // pred_check_branch
        %738 = sbr.rel (%p736) target = $region44
      $region43: #{conv_block_forward.4} parent=39 // pred_region
        %s739 = smul.u32 2, %s18
      $region44: #{conv_block_forward.4} parent=39 // pred_fallthru
        _
      // Predicated region
      $region45: #{conv_block_forward.4} parent=39 // pred_check
        %p740 = pneg %p172
      $region46: #{conv_block_forward.4} parent=39 // pred_check_branch
        %742 = sbr.rel (%p740) target = $region48
      $region47: #{conv_block_forward.4} parent=39 // pred_region
        _
      $region48: #{conv_block_forward.4} parent=39 // pred_fallthru
        _
    $region40: #{conv_block_forward.4} parent=5 // pred_fallthru
      _
    %p743 = scmp.le.s32.totalorder 2, %s13
    // Predicated region
    $region49: #{conv_block_forward.4} parent=5 // pred_check
      %p744 = pneg %p743
    $region50: #{conv_block_forward.4} parent=5 // pred_check_branch
      %746 = sbr.rel (%p744) target = $region52
    $region51: #{conv_block_forward.4} parent=5 // pred_region
      %s747 = ssub.s32 %s13, 2
      // Predicated region
      $region53: #{conv_block_forward.4} parent=51 // pred_check
        %p748 = pneg %p152
      $region54: #{conv_block_forward.4} parent=51 // pred_check_branch
        %750 = sbr.rel (%p748) target = $region56
      $region55: #{conv_block_forward.4} parent=51 // pred_region
        %s751 = smul.u32 2, %s19
        %p752 = scmp.lt.s32.totalorder %s751, 3
        %s753 = scalar_select %p752, %s751, 3
        %s754 = smul.addr %s753, 4
        %s755 = scalar_lea.vmem %s5, %s754
      $region56: #{conv_block_forward.4} parent=51 // pred_fallthru
        _
      // Predicated region
      $region57: #{conv_block_forward.4} parent=51 // pred_check
        %p756 = pneg %p178
      $region58: #{conv_block_forward.4} parent=51 // pred_check_branch
        %758 = sbr.rel (%p756) target = $region60
      $region59: #{conv_block_forward.4} parent=51 // pred_region
        %p759 = scmp.lt.s32.totalorder %s19, 1
        %s760 = scalar_select %p759, %s19, 1
        %s761 = smul.addr %s760, 2
        %s762 = scalar_lea.vmem %s6, %s761
      $region60: #{conv_block_forward.4} parent=51 // pred_fallthru
        _
    $region52: #{conv_block_forward.4} parent=5 // pred_fallthru
      _
  $region6: #{conv_block_forward.4} parent=0 // loop_footer
    %s17 = sadd.s32 1, %s13
  $region7: #{conv_block_forward.4} parent=0 // loop_footer_branch
    %12 = sbr.rel target = $region3
  $region8: #{conv_block_forward.4} parent=0 // loop_exit
    _

// kernel: conv_block_forward.5
$region0: #{conv_block_forward.5}
  #allocation0 [shape = 'u32[]', space=smem, size = 0x4, offset = 0x4, fixed_abs, tag = 'smem constant byte address 0x4 - core index']
  #allocation1 [shape = 'u32[144,128]{1,0:T(1,128)}', space=vmem, size = 0x12000, scoped, tag = 'internal scratch']
  %s0 = inlined_call_operand.vmem [shape: bf16[32,128], index: 0, kind: input, shape index: {}]
  %s1 = inlined_call_operand.vmem [shape: f32[1,128], index: 1, kind: input, shape index: {}]
  %s2 = inlined_call_operand.vmem [shape: f32[1,128], index: 2, kind: input, shape index: {}]
  %s3 = inlined_call_operand.vmem [shape: f32[32,128], index: 3, kind: output, shape index: {}]
  %s4 = sld [smem:[#allocation0]]
  $region45: #{conv_block_forward.5} parent=0
    _
  %s6 = ssub.s32 1, %s4
  %s7 = scalar_select 0, %s6, %s4
  loop: start=0, step=1, limit=4
  $region2: #{conv_block_forward.5} parent=0 // loop_pre_header
    _
  $region3: #{conv_block_forward.5} parent=0 // loop_header
    %s9 = sphi 0, %s13
    %p10 = scmp.ge.s32.totalorder %s9, 4
    %s19 = sphi 0, %s21
    %s22 = sphi 0, %s19
    %s23 = sphi 0, %s22
    %s39 = sphi 0, %s23
    %s43 = sphi 0, %s43
    %s45 = sphi 0, %s43
    %s46 = sphi 0, %s45
    %s60 = sphi 0, %s46
    %s64 = sphi 0, %s64
    %s66 = sphi 0, %s64
    %s67 = sphi 0, %s66
    %s81 = sphi 0, %s67
    %s87 = sphi 0, %s89
    %s90 = sphi 0, %s87
    %s91 = sphi 0, %s90
    %s107 = sphi 0, %s91
  $region4: #{conv_block_forward.5} parent=0 // loop_header_branch
    %12 = sbr.rel (%p10) target = $region8
  $region5: #{conv_block_forward.5} parent=0 // loop_body
    %s14 = ssub.s32 %s9, 1
    %s15 = ssub.s32 %s9, 2
    %s16 = sadd.s32 %s9, 1
    %s17 = ssub.s32 %s9, %s16
    %p18 = scmp.eq.s32.totalorder %s17, 0
    %s20 = sadd.s32 %s19, 1
    %s21 = scalar_select %p18, %s19, %s20
    %p24 = pneg %p18
    %p25 = scmp.eq.s32.totalorder %s9, 1
    %p26 = por %p24, %p25
    %p27 = scmp.ne.s32.totalorder %s19, %s22
    %p28 = scmp.eq.s32.totalorder %s9, 0
    %p29 = por %p27, %p28
    %p30 = scmp.ne.s32.totalorder %s19, %s22
    %p31 = scmp.eq.s32.totalorder %s14, 1
    %p32 = por %p30, %p31
    %p33 = scmp.ne.s32.totalorder %s22, %s23
    %p34 = scmp.eq.s32.totalorder %s14, 0
    %p35 = por %p33, %p34
    %p36 = scmp.ne.s32.totalorder %s22, %s23
    %p37 = scmp.eq.s32.totalorder %s15, 1
    %p38 = por %p36, %p37
    %p40 = scmp.ne.s32.totalorder %s23, %s39
    %p41 = scmp.eq.s32.totalorder %s15, 0
    %p42 = por %p40, %p41
    %s44 = sadd.s32 %s43, 1
    %p47 = scmp.eq.s32.totalorder %s9, 1
    %p48 = scmp.ne.s32.totalorder %s43, %s45
    %p49 = scmp.eq.s32.totalorder %s9, 0
    %p50 = por %p48, %p49
    %p51 = scmp.ne.s32.totalorder %s43, %s45
    %p52 = scmp.eq.s32.totalorder %s14, 1
    %p53 = por %p51, %p52
    %p54 = scmp.ne.s32.totalorder %s45, %s46
    %p55 = scmp.eq.s32.totalorder %s14, 0
    %p56 = por %p54, %p55
    %p57 = scmp.ne.s32.totalorder %s45, %s46
    %p58 = scmp.eq.s32.totalorder %s15, 1
    %p59 = por %p57, %p58
    %p61 = scmp.ne.s32.totalorder %s46, %s60
    %p62 = scmp.eq.s32.totalorder %s15, 0
    %p63 = por %p61, %p62
    %s65 = sadd.s32 %s64, 1
    %p68 = scmp.eq.s32.totalorder %s9, 1
    %p69 = scmp.ne.s32.totalorder %s64, %s66
    %p70 = scmp.eq.s32.totalorder %s9, 0
    %p71 = por %p69, %p70
    %p72 = scmp.ne.s32.totalorder %s64, %s66
    %p73 = scmp.eq.s32.totalorder %s14, 1
    %p74 = por %p72, %p73
    %p75 = scmp.ne.s32.totalorder %s66, %s67
    %p76 = scmp.eq.s32.totalorder %s14, 0
    %p77 = por %p75, %p76
    %p78 = scmp.ne.s32.totalorder %s66, %s67
    %p79 = scmp.eq.s32.totalorder %s15, 1
    %p80 = por %p78, %p79
    %p82 = scmp.ne.s32.totalorder %s67, %s81
    %p83 = scmp.eq.s32.totalorder %s15, 0
    %p84 = por %p82, %p83
    %s85 = ssub.s32 %s9, %s16
    %p86 = scmp.eq.s32.totalorder %s85, 0
    %s88 = sadd.s32 %s87, 1
    %s89 = scalar_select %p86, %s87, %s88
    %p92 = pneg %p86
    %p93 = scmp.eq.s32.totalorder %s9, 1
    %p94 = por %p92, %p93
    %p95 = scmp.ne.s32.totalorder %s87, %s90
    %p96 = scmp.eq.s32.totalorder %s9, 0
    %p97 = por %p95, %p96
    %p98 = scmp.ne.s32.totalorder %s87, %s90
    %p99 = scmp.eq.s32.totalorder %s14, 1
    %p100 = por %p98, %p99
    %p101 = scmp.ne.s32.totalorder %s90, %s91
    %p102 = scmp.eq.s32.totalorder %s14, 0
    %p103 = por %p101, %p102
    %p104 = scmp.ne.s32.totalorder %s90, %s91
    %p105 = scmp.eq.s32.totalorder %s15, 1
    %p106 = por %p104, %p105
    %p108 = scmp.ne.s32.totalorder %s91, %s107
    %p109 = scmp.eq.s32.totalorder %s15, 0
    %p110 = por %p108, %p109
    %p111 = scmp.le.s32.totalorder 1, %s9
    %p112 = scmp.lt.s32.totalorder %s9, 3
    %p113 = pnand %p111, %p112
    %p114 = pneg %p113
    // Predicated region
    $region9: #{conv_block_forward.5} parent=5 // pred_check
      _
    $region10: #{conv_block_forward.5} parent=5 // pred_check_branch
      %116 = sbr.rel (%p113) target = $region12
    $region11: #{conv_block_forward.5} parent=5 // pred_region
      %s117 = ssub.s32 %s9, 1
      // Predicated region
      $region13: #{conv_block_forward.5} parent=11 // pred_check
        %p118 = pneg %p56
      $region14: #{conv_block_forward.5} parent=11 // pred_check_branch
        %120 = sbr.rel (%p118) target = $region16
      $region15: #{conv_block_forward.5} parent=11 // pred_region
        _
      $region16: #{conv_block_forward.5} parent=11 // pred_fallthru
        _
      // Predicated region
      $region17: #{conv_block_forward.5} parent=11 // pred_check
        %p121 = pneg %p77
      $region18: #{conv_block_forward.5} parent=11 // pred_check_branch
        %123 = sbr.rel (%p121) target = $region20
      $region19: #{conv_block_forward.5} parent=11 // pred_region
        _
      $region20: #{conv_block_forward.5} parent=11 // pred_fallthru
        _
    $region12: #{conv_block_forward.5} parent=5 // pred_fallthru
      _
    %p124 = scmp.lt.s32.totalorder %s9, 2
    // Predicated region
    $region21: #{conv_block_forward.5} parent=5 // pred_check
      %p125 = pneg %p124
    $region22: #{conv_block_forward.5} parent=5 // pred_check_branch
      %127 = sbr.rel (%p125) target = $region24
    $region23: #{conv_block_forward.5} parent=5 // pred_region
      // Predicated region
      $region25: #{conv_block_forward.5} parent=23 // pred_check
        %p128 = pneg %p29
      $region26: #{conv_block_forward.5} parent=23 // pred_check_branch
        %130 = sbr.rel (%p128) target = $region28
      $region27: #{conv_block_forward.5} parent=23 // pred_region
        %s131 = smul.u32 2, %s9
        %p132 = scmp.lt.s32.totalorder %s131, 3
        %s133 = scalar_select %p132, %s131, 3
        %s134 = smul.addr %s133, 4
        %s135 = scalar_lea.vmem %s0, %s134
        %s136 = smul.u32 2, %s9
      $region28: #{conv_block_forward.5} parent=23 // pred_fallthru
        _
    $region24: #{conv_block_forward.5} parent=5 // pred_fallthru
      _
    %p137 = scmp.le.s32.totalorder 1, %s9
    %p138 = scmp.lt.s32.totalorder %s9, 3
    %p139 = pnand %p137, %p138
    %p140 = pneg %p139
    // Predicated region
    $region29: #{conv_block_forward.5} parent=5 // pred_check
      _
    $region30: #{conv_block_forward.5} parent=5 // pred_check_branch
      %142 = sbr.rel (%p139) target = $region32
    $region31: #{conv_block_forward.5} parent=5 // pred_region
      %s143 = ssub.s32 %s9, 1
      %s144 = smul.u32 2, %s14
      %p145 = scmp.lt.s32.totalorder %s144, 3
      %s146 = scalar_select %p145, %s144, 3
      %s147 = smul.addr %s146, 4
      %s148 = scalar_lea.vmem %s0, %s147
      %p149 = pneg %p35
      %p150 = pneg %p32
      %p151 = pneg %p56
      %p152 = pneg %p53
      %p153 = pneg %p77
      %p154 = pneg %p74
      %p155 = pneg %p103
      %p156 = pneg %p100
      %s157 = smul.u32 2, %s14
      %p158 = scmp.lt.s32.totalorder %s157, 3
      %s159 = scalar_select %p158, %s157, 3
      %s160 = smul.addr %s159, 8
      %s161 = scalar_lea.vmem %s3, %s160
      %s162 = smul.u32 2, %s14
      %p163 = scmp.lt.s32.totalorder %s162, 3
      %s164 = scalar_select %p163, %s162, 3
      %s165 = smul.addr %s164, 4
      %s166 = scalar_lea.vmem %s0, %s165
      %s167 = smul.u32 2, %s14
      %s168 = smul.u32 2, %s14
      %p169 = scmp.lt.s32.totalorder %s168, 3
      %s170 = scalar_select %p169, %s168, 3
      %s171 = smul.addr %s170, 8
      %s172 = scalar_lea.vmem %s3, %s171
      %s173 = smul.u32 2, %s14
      %v174 = vld [vmem:[%s166] sm:$0xf]
      %v175 = vld [vmem:[%s166 + $0x4] sm:$0xf]
      %v176 = vunpack.c.l.bf16 %v174
      %v177 = vunpack.c.l.bf16 %v175
      %v178 = vld [vmem:[%s1] sm:$0x1]
      %v180 = vlaneseq
      %v181 = vshrl.u32 %v180, 7
      %v182 = vsub.s32 0, %v181
      %v183 = vrot.slane %v178, %v182
      %v185 = vmul.f32 %v176, %v183
      %v186 = vmul.f32 %v177, %v183
      %v187 = vld [vmem:[%s2] sm:$0x1]
      %v189 = vlaneseq
      %v190 = vshrl.u32 %v189, 7
      %v191 = vsub.s32 0, %v190
      %v192 = vrot.slane %v187, %v191
      %v194 = vadd.f32 %v185, %v192
      %v195 = vadd.f32 %v186, %v192
      %196 = vst [vmem:[%s172] sm:$0xff] %v194
      %197 = vst [vmem:[%s172 + $0x8] sm:$0xff] %v195
      %s198 = smul.u32 2, %s14
      %p199 = scmp.lt.s32.totalorder %s198, 3
      %s200 = scalar_select %p199, %s198, 3
      %s201 = smul.addr %s200, 8
      %s202 = scalar_lea.vmem %s3, %s201
      // Predicated region
      $region33: #{conv_block_forward.5} parent=31 // pred_check
        %p203 = pneg %p100
      $region34: #{conv_block_forward.5} parent=31 // pred_check_branch
        %205 = sbr.rel (%p203) target = $region36
      $region35: #{conv_block_forward.5} parent=31 // pred_region
        %s206 = smul.u32 2, %s14
      $region36: #{conv_block_forward.5} parent=31 // pred_fallthru
        _
    $region32: #{conv_block_forward.5} parent=5 // pred_fallthru
      _
    %p207 = scmp.le.s32.totalorder 2, %s9
    // Predicated region
    $region37: #{conv_block_forward.5} parent=5 // pred_check
      %p208 = pneg %p207
    $region38: #{conv_block_forward.5} parent=5 // pred_check_branch
      %210 = sbr.rel (%p208) target = $region40
    $region39: #{conv_block_forward.5} parent=5 // pred_region
      %s211 = ssub.s32 %s9, 2
      // Predicated region
      $region41: #{conv_block_forward.5} parent=39 // pred_check
        %p212 = pneg %p106
      $region42: #{conv_block_forward.5} parent=39 // pred_check_branch
        %214 = sbr.rel (%p212) target = $region44
      $region43: #{conv_block_forward.5} parent=39 // pred_region
        %s215 = smul.u32 2, %s15
        %p216 = scmp.lt.s32.totalorder %s215, 3
        %s217 = scalar_select %p216, %s215, 3
        %s218 = smul.addr %s217, 8
        %s219 = scalar_lea.vmem %s3, %s218
      $region44: #{conv_block_forward.5} parent=39 // pred_fallthru
        _
    $region40: #{conv_block_forward.5} parent=5 // pred_fallthru
      _
  $region6: #{conv_block_forward.5} parent=0 // loop_footer
    %s13 = sadd.s32 1, %s9
  $region7: #{conv_block_forward.5} parent=0 // loop_footer_branch
    %8 = sbr.rel target = $region3
  $region8: #{conv_block_forward.5} parent=0 // loop_exit
    _

</llo_original>
